<compile_context>
chip_gen: v7x
topology: tpu7x:2x2x1
jax: 0.10.0
libtpu: 0.0.40
codegen_flags: <defaults>
</compile_context>

<pallas_src>
import functools

import jax
import jax.numpy as jnp
from jax import lax
from jax.experimental import pallas as pl
from jax.experimental.pallas import tpu as pltpu

F32_MIN = float(jnp.finfo(jnp.float32).min)
NEG_BIG = -1e30


def _sanm_attention_kernel(
    lens_ref,     # (B,) int32 SMEM (scalar prefetch): per-batch valid length
    x_ref,        # (1, Tp, in_feat)  bf16
    wqkv_ref,     # (in_feat, 3F)     bf16 (pre-transposed)
    bqkv_ref,     # (1, 3F)           f32
    wfsmn_ref,    # (K, F)            f32 depthwise conv taps
    wout_ref,     # (F, F)            bf16 (pre-transposed)
    bout_ref,     # (1, F)            f32
    o_ref,        # (1, Tp, F)        f32
    q_bf_ref,     # scratch (Tp, F)   bf16
    k_bf_ref,     # scratch (Tp, F)   bf16
    v_bf_ref,     # scratch (Tp, F)   bf16
    *,
    n_head,
    d_k,
    kernel_size,
    left_pad,
    right_pad,
    t_valid,
    tq,
):
    n_feat = n_head * d_k
    Tp = x_ref.shape[1]
    num_q_tiles = Tp // tq

    b = pl.program_id(0)
    t_len = lens_ref[b]                               # scalar int32 from SMEM

    row = lax.broadcasted_iota(jnp.int32, (Tp, 1), 0)
    col = lax.broadcasted_iota(jnp.int32, (1, Tp), 1)
    keep_t = row < t_len                              # (Tp, 1) time-validity mask

    # ---- fused QKV projection: one bf16 MXU matmul, f32 accumulate ----
    x = x_ref[0]                                      # (Tp, in_feat) bf16
    qkv = (
        jnp.dot(x, wqkv_ref[...], preferred_element_type=jnp.float32)
        + bqkv_ref[...]
    )                                                 # (Tp, 3F) f32
    q = qkv[:, 0 * n_feat:1 * n_feat]
    k = qkv[:, 1 * n_feat:2 * n_feat]
    v = qkv[:, 2 * n_feat:3 * n_feat]

    # ---- FSMN memory: depthwise conv1d over time on masked v (XLU roll + VPU) --
    v_m = jnp.where(keep_t, v, 0.0)                   # (Tp, F) f32, masked rows 0
    taps = wfsmn_ref[...]                             # (K, F)
    # torch ConstantPad1d with negative right padding crops the tail -> explicit
    # static upper bound on the source row index; otherwise zero-padded rows of
    # v_m already make the full-Tp window correct.
    src_hi = Tp if right_pad >= 0 else t_valid + right_pad
    fsmn = v_m                                        # residual add (x += inputs)
    for kk in range(kernel_size):
        s = kk - left_pad                             # source time offset of tap kk
        if (s % Tp) != 0:
            shifted = pltpu.roll(v_m, (-s) % Tp, axis=0)   # XLU sublane rotate
        else:
            shifted = v_m
        lo_k = max(0, -s)
        hi_k = min(Tp, src_hi - s)
        if lo_k > 0 and hi_k < Tp:
            keep = (row >= lo_k) & (row < hi_k)
        elif lo_k > 0:
            keep = row >= lo_k
        elif hi_k < Tp:
            keep = row < hi_k
        else:
            keep = None
        if keep is not None:                          # zero wrapped / cropped rows
            shifted = jnp.where(keep, shifted, 0.0)
        fsmn = fsmn + shifted * taps[kk:kk + 1, :]
    fsmn = jnp.where(keep_t, fsmn, 0.0)
    # TODO(synk): nn.Dropout is identity in eval/inference mode; omitted here.

    # fsmn goes straight into the output block; attention tiles accumulate on top.
    o_ref[0] = fsmn

    # ---- stage bf16 q/k/v once (no head transposes; heads are column slices) ----
    scale = d_k ** (-0.5)
    q_bf_ref[...] = (q * scale).astype(jnp.bfloat16)
    k_bf_ref[...] = k.astype(jnp.bfloat16)
    v_bf_ref[...] = v.astype(jnp.bfloat16)

    # additive key-mask bias: 0 keep / -1e30 masked (exp underflows to exactly 0)
    bias = jnp.where(col < t_len, 0.0, NEG_BIG)       # (1, Tp) f32

    def q_tile(qi, carry):
        lo = pl.multiple_of(qi * tq, tq)
        sl = pl.ds(lo, tq)
        acc = jnp.zeros((tq, n_feat), jnp.float32)
        for h in range(n_head):
            c0, c1 = h * d_k, (h + 1) * d_k
            qh = q_bf_ref[sl, c0:c1]                  # (tq, d_k) bf16
            kh = k_bf_ref[:, c0:c1]                   # (Tp, d_k) bf16
            scores = lax.dot_general(
                qh, kh, (((1,), (1,)), ((), ())),
                preferred_element_type=jnp.float32) + bias        # (tq, Tp)
            m = jnp.max(scores, axis=-1, keepdims=True)
            p = jnp.exp(scores - m)                   # masked keys -> exactly 0
            denom = jnp.maximum(jnp.sum(p, axis=-1, keepdims=True), 1e-30)
            p = p * pl.reciprocal(denom, approx=True)  # EUP slot
            ctx = jnp.dot(p.astype(jnp.bfloat16), v_bf_ref[:, c0:c1],
                          preferred_element_type=jnp.float32)     # (tq, d_k)
            # head-concat + output projection folded into per-head accumulated dots
            acc = acc + jnp.dot(ctx.astype(jnp.bfloat16), wout_ref[c0:c1, :],
                                preferred_element_type=jnp.float32)
        # bout added once per tile (hoisted out of the head loop); fsmn already in o_ref
        o_ref[0, sl, :] = o_ref[0, sl, :] + acc + bout_ref[...]
        return carry

    lax.fori_loop(0, num_q_tiles, q_tile, 0)


def _round_up(a, m):
    return (a + m - 1) // m * m


def _vmem_capacity_bytes():
    try:
        return int(pltpu.get_tpu_info().vmem_capacity_bytes)
    except Exception:
        return 64 * 1024 * 1024   # conservative (v7x-sized) fallback


def sanm_attention(x, mask, params, *, n_head, kernel_size, sanm_shift=0):
    """x: (B, T, in_feat) float32; mask: (B, 1, T) float32 (1 = keep, 0 = pad)."""
    B, T, in_feat = x.shape
    w_qkv = params["w_qkv"]                # (3F, in_feat)   torch Linear layout
    b_qkv = params["b_qkv"]                # (3F,)
    w_fsmn = params["w_fsmn"]              # (F, 1, K)       torch Conv1d depthwise
    w_out = params["w_out"]                # (F, F)
    b_out = params["b_out"]                # (F,)

    n_feat = w_qkv.shape[0] // 3
    d_k = n_feat // n_head
    left_pad = (kernel_size - 1) // 2
    if sanm_shift > 0:
        left_pad += sanm_shift
    right_pad = kernel_size - 1 - left_pad

    # generation-specific VMEM budget and query-tile size
    vmem_cap = _vmem_capacity_bytes()
    vmem_limit = int(min(vmem_cap - (12 << 20), 100 << 20))

    if T <= 128:
        Tp = _round_up(T, 16)
        tq = Tp
    else:
        tq = 256 if vmem_cap >= (100 << 20) else 128
        Tp = _round_up(T, tq)
    pad_t = Tp - T

    x_p = jnp.pad(jnp.asarray(x, jnp.float32),
                  ((0, 0), (0, pad_t), (0, 0))).astype(jnp.bfloat16)

    # TODO(synk): this fast path assumes a contiguous key-padding mask (B, 1, T);
    #             arbitrary chunk masks would need the full mask-tensor path.
    lens = jnp.sum(jnp.asarray(mask, jnp.float32).reshape(B, -1)[:, :T] > 0,
                   axis=-1).astype(jnp.int32)                       # (B,)

    # glue: transpose / reshape / cast params outside the kernel
    wqkv_t = jnp.asarray(w_qkv, jnp.float32).T.astype(jnp.bfloat16)          # (in, 3F)
    bqkv = jnp.asarray(b_qkv, jnp.float32).reshape(1, -1)
    wfsmn_kf = jnp.transpose(jnp.asarray(w_fsmn, jnp.float32)[:, 0, :], (1, 0))  # (K, F)
    wout_t = jnp.asarray(w_out, jnp.float32).T.astype(jnp.bfloat16)          # (F, F)
    bout = jnp.asarray(b_out, jnp.float32).reshape(1, -1)

    kernel = functools.partial(
        _sanm_attention_kernel,
        n_head=n_head, d_k=d_k, kernel_size=kernel_size,
        left_pad=left_pad, right_pad=right_pad, t_valid=T, tq=tq)

    grid_spec = pltpu.PrefetchScalarGridSpec(
        num_scalar_prefetch=1,
        grid=(B,),
        in_specs=[
            pl.BlockSpec((1, Tp, in_feat), lambda b, lens: (b, 0, 0)),
            # grid-invariant weights (constant index_map -> fetched once).
            # TODO(synk): pipeline_mode=pl.Buffered(1) on these would drop the
            #             unused second buffer for extra v7x VMEM headroom.
            pl.BlockSpec((in_feat, 3 * n_feat), lambda b, lens: (0, 0)),
            pl.BlockSpec((1, 3 * n_feat), lambda b, lens: (0, 0)),
            pl.BlockSpec((kernel_size, n_feat), lambda b, lens: (0, 0)),
            pl.BlockSpec((n_feat, n_feat), lambda b, lens: (0, 0)),
            pl.BlockSpec((1, n_feat), lambda b, lens: (0, 0)),
        ],
        out_specs=pl.BlockSpec((1, Tp, n_feat), lambda b, lens: (b, 0, 0)),
        scratch_shapes=[
            pltpu.VMEM((Tp, n_feat), jnp.bfloat16),   # q (pre-scaled)
            pltpu.VMEM((Tp, n_feat), jnp.bfloat16),   # k
            pltpu.VMEM((Tp, n_feat), jnp.bfloat16),   # v
        ],
    )

    out = pl.pallas_call(
        kernel,
        out_shape=jax.ShapeDtypeStruct((B, Tp, n_feat), jnp.float32),
        grid_spec=grid_spec,
        compiler_params=pltpu.CompilerParams(
            dimension_semantics=("parallel",),
            vmem_limit_bytes=vmem_limit),
    )(lens, x_p, wqkv_t, bqkv, wfsmn_kf, wout_t, bout)
    return out[:, :T, :]


def sanm_attention_reference(x, mask, params, *, n_head, kernel_size, sanm_shift=0):
    """Pure-JAX f32 reference mirroring the PyTorch forward (eval mode)."""
    B, T, _ = x.shape
    w_qkv, b_qkv = params["w_qkv"], params["b_qkv"]
    w_fsmn, w_out, b_out = params["w_fsmn"], params["w_out"], params["b_out"]
    n_feat = w_qkv.shape[0] // 3
    d_k = n_feat // n_head

    qkv = x @ w_qkv.T + b_qkv
    q, k, v = jnp.split(qkv, 3, axis=-1)

    def split_heads(a):
        return a.reshape(B, T, n_head, d_k).transpose(0, 2, 1, 3)

    q_h, k_h, v_h = split_heads(q), split_heads(k), split_heads(v)

    # fsmn
    m = mask.reshape(B, T, 1)
    v_m = v * m
    left = (kernel_size - 1) // 2
    if sanm_shift > 0:
        left += sanm_shift
    right = kernel_size - 1 - left                    # test configs keep right >= 0
    padded = jnp.pad(v_m, ((0, 0), (left, right), (0, 0)))
    w_f = w_fsmn[:, 0, :]                             # (F, K)
    conv = jnp.zeros_like(v_m)
    for kk in range(kernel_size):
        conv = conv + padded[:, kk:kk + T, :] * w_f[:, kk][None, None, :]
    fsmn = (conv + v_m) * m

    # attention
    scores = jnp.einsum("bhtd,bhsd->bhts", q_h * d_k ** (-0.5), k_h)
    neg = mask.reshape(B, 1, 1, T) == 0
    scores = jnp.where(neg, F32_MIN, scores)
    p = jax.nn.softmax(scores, axis=-1)
    p = jnp.where(neg, 0.0, p)
    ctx = jnp.einsum("bhts,bhsd->bhtd", p, v_h)
    ctx = ctx.transpose(0, 2, 1, 3).reshape(B, T, n_feat)
    att = ctx @ w_out.T + b_out
    return att + fsmn


if __name__ == "__main__":
    # small but TPU-friendly head geometry (d_k = 128, feature dims % 128 == 0)
    B, T = 2, 16
    in_feat, n_feat, n_head, kernel_size = 256, 256, 2, 11

    key = jax.random.PRNGKey(0)
    ks = jax.random.split(key, 6)
    x = jax.random.normal(ks[0], (B, T, in_feat), jnp.float32)
    params = {
        "w_qkv": 0.05 * jax.random.normal(ks[1], (3 * n_feat, in_feat), jnp.float32),
        "b_qkv": 0.05 * jax.random.normal(ks[2], (3 * n_feat,), jnp.float32),
        "w_fsmn": 0.05 * jax.random.normal(ks[3], (n_feat, 1, kernel_size), jnp.float32),
        "w_out": 0.05 * jax.random.normal(ks[4], (n_feat, n_feat), jnp.float32),
        "b_out": 0.05 * jax.random.normal(ks[5], (n_feat,), jnp.float32),
    }
    # padding mask: batch 1 has its last 4 frames masked out
    mask = jnp.ones((B, 1, T), jnp.float32).at[1, 0, 12:].set(0.0)

    # sanm_shift = 0 (default encoder config)
    out = jax.block_until_ready(
        sanm_attention(x, mask, params, n_head=n_head, kernel_size=kernel_size))
    ref = sanm_attention_reference(
        x, mask, params, n_head=n_head, kernel_size=kernel_size)
    assert out.shape == (B, T, n_feat)
    assert jnp.allclose(out, ref, atol=5e-2, rtol=5e-2), float(
        jnp.max(jnp.abs(out - ref)))

    # sanm_shift > 0 (asymmetric FSMN padding / wrap-masking path)
    out_s = jax.block_until_ready(
        sanm_attention(x, mask, params, n_head=n_head, kernel_size=kernel_size,
                       sanm_shift=2))
    ref_s = sanm_attention_reference(
        x, mask, params, n_head=n_head, kernel_size=kernel_size, sanm_shift=2)
    assert jnp.allclose(out_s, ref_s, atol=5e-2, rtol=5e-2), float(
        jnp.max(jnp.abs(out_s - ref_s)))

    print("KERNEL_OK")
</pallas_src>

<mosaic_0001>
module attributes {stable_mosaic.version = 11 : i64} {
  func.func @_sanm_attention_kernel(%arg0: i32, %arg1: memref<2xi32, #tpu.memory_space<smem>>, %arg2: memref<1x16x256xbf16, #tpu.memory_space<vmem>>, %arg3: memref<256x768xbf16, #tpu.memory_space<vmem>>, %arg4: memref<1x768xf32, #tpu.memory_space<vmem>>, %arg5: memref<11x256xf32, #tpu.memory_space<vmem>>, %arg6: memref<256x256xbf16, #tpu.memory_space<vmem>>, %arg7: memref<1x256xf32, #tpu.memory_space<vmem>>, %arg8: memref<1x16x256xf32, #tpu.memory_space<vmem>>, %arg9: memref<16x256xbf16, #tpu.memory_space<vmem>>, %arg10: memref<16x256xbf16, #tpu.memory_space<vmem>>, %arg11: memref<16x256xbf16, #tpu.memory_space<vmem>>) attributes {dimension_semantics = [#tpu.dimension_semantics<parallel>], iteration_bounds = array<i64: 2>, scalar_prefetch = 1 : i64, scratch_operands = 3 : i64, tpu.core_type = #tpu.core_type<tc>, window_params = [{transform_indices = @transform_0, window_bounds = array<i64: 1, 16, 256>}, {pipeline_mode = #tpu.pipeline_mode<synchronous>, transform_indices = @transform_1, window_bounds = array<i64: 256, 768>}, {pipeline_mode = #tpu.pipeline_mode<synchronous>, transform_indices = @transform_2, window_bounds = array<i64: 1, 768>}, {pipeline_mode = #tpu.pipeline_mode<synchronous>, transform_indices = @transform_3, window_bounds = array<i64: 11, 256>}, {pipeline_mode = #tpu.pipeline_mode<synchronous>, transform_indices = @transform_4, window_bounds = array<i64: 256, 256>}, {pipeline_mode = #tpu.pipeline_mode<synchronous>, transform_indices = @transform_5, window_bounds = array<i64: 1, 256>}, {transform_indices = @transform_6, window_bounds = array<i64: 1, 16, 256>}]} {
    %0 = arith.index_cast %arg0 : i32 to index
    %1 = memref.load %arg1[%0] : memref<2xi32, #tpu.memory_space<smem>>
    %2 = tpu.iota {dimensions = array<i32: 0>} : vector<16x1xi32>
    %3 = tpu.iota {dimensions = array<i32: 1>} : vector<1x16xi32>
    %4 = vector.broadcast %1 : i32 to vector<16x1xi32>
    %5 = arith.cmpi slt, %2, %4 : vector<16x1xi32>
    %c0 = arith.constant 0 : index
    %c0_0 = arith.constant 0 : index
    %c0_1 = arith.constant 0 : index
    %6 = vector.load %arg2[%c0, %c0_0, %c0_1] : memref<1x16x256xbf16, #tpu.memory_space<vmem>>, vector<1x16x256xbf16>
    %7 = vector.shape_cast %6 : vector<1x16x256xbf16> to vector<16x256xbf16>
    %c0_2 = arith.constant 0 : index
    %c0_3 = arith.constant 0 : index
    %8 = vector.load %arg3[%c0_2, %c0_3] : memref<256x768xbf16, #tpu.memory_space<vmem>>, vector<256x768xbf16>
    %cst = arith.constant dense<0.000000e+00> : vector<16x768xf32>
    %9 = tpu.matmul %7, %8, %cst {dimension_numbers = #tpu.dot_dimension_numbers<[1], [0], [0], [1], [0, 0, 1, 1], [], []>} : vector<16x256xbf16>, vector<256x768xbf16>, vector<16x768xf32> -> vector<16x768xf32>
    %c0_4 = arith.constant 0 : index
    %c0_5 = arith.constant 0 : index
    %10 = vector.load %arg4[%c0_4, %c0_5] : memref<1x768xf32, #tpu.memory_space<vmem>>, vector<1x768xf32>
    %11 = vector.broadcast %10 : vector<1x768xf32> to vector<16x768xf32>
    %12 = arith.addf %9, %11 : vector<16x768xf32>
    %13 = vector.extract_strided_slice %12 {offsets = [0, 0], sizes = [16, 256], strides = [1, 1]} : vector<16x768xf32> to vector<16x256xf32>
    %14 = vector.extract_strided_slice %12 {offsets = [0, 256], sizes = [16, 256], strides = [1, 1]} : vector<16x768xf32> to vector<16x256xf32>
    %15 = vector.extract_strided_slice %12 {offsets = [0, 512], sizes = [16, 256], strides = [1, 1]} : vector<16x768xf32> to vector<16x256xf32>
    %cst_6 = arith.constant 0.000000e+00 : f32
    %16 = vector.shape_cast %5 : vector<16x1xi1> to vector<16x1xi1>
    %17 = vector.broadcast %16 : vector<16x1xi1> to vector<16x256xi1>
    %18 = vector.broadcast %cst_6 : f32 to vector<16x256xf32>
    %19 = arith.select %17, %15, %18 : vector<16x256xi1>, vector<16x256xf32>
    %c0_7 = arith.constant 0 : index
    %c0_8 = arith.constant 0 : index
    %20 = vector.load %arg5[%c0_7, %c0_8] : memref<11x256xf32, #tpu.memory_space<vmem>>, vector<11x256xf32>
    %c5_i32 = arith.constant 5 : i32
    %21 = tpu.dynamic_rotate %19 by %c5_i32 dim 0 : vector<16x256xf32>, i32 -> vector<16x256xf32>
    %c5_i32_9 = arith.constant 5 : i32
    %22 = vector.broadcast %c5_i32_9 : i32 to vector<16x1xi32>
    %23 = arith.cmpi sge, %2, %22 : vector<16x1xi32>
    %cst_10 = arith.constant 0.000000e+00 : f32
    %24 = vector.shape_cast %23 : vector<16x1xi1> to vector<16x1xi1>
    %25 = vector.broadcast %24 : vector<16x1xi1> to vector<16x256xi1>
    %26 = vector.broadcast %cst_10 : f32 to vector<16x256xf32>
    %27 = arith.select %25, %21, %26 : vector<16x256xi1>, vector<16x256xf32>
    %28 = vector.extract_strided_slice %20 {offsets = [0, 0], sizes = [1, 256], strides = [1, 1]} : vector<11x256xf32> to vector<1x256xf32>
    %29 = vector.broadcast %28 : vector<1x256xf32> to vector<16x256xf32>
    %30 = arith.mulf %27, %29 : vector<16x256xf32>
    %31 = arith.addf %19, %30 : vector<16x256xf32>
    %c4_i32 = arith.constant 4 : i32
    %32 = tpu.dynamic_rotate %19 by %c4_i32 dim 0 : vector<16x256xf32>, i32 -> vector<16x256xf32>
    %c4_i32_11 = arith.constant 4 : i32
    %33 = vector.broadcast %c4_i32_11 : i32 to vector<16x1xi32>
    %34 = arith.cmpi sge, %2, %33 : vector<16x1xi32>
    %cst_12 = arith.constant 0.000000e+00 : f32
    %35 = vector.shape_cast %34 : vector<16x1xi1> to vector<16x1xi1>
    %36 = vector.broadcast %35 : vector<16x1xi1> to vector<16x256xi1>
    %37 = vector.broadcast %cst_12 : f32 to vector<16x256xf32>
    %38 = arith.select %36, %32, %37 : vector<16x256xi1>, vector<16x256xf32>
    %39 = vector.extract_strided_slice %20 {offsets = [1, 0], sizes = [1, 256], strides = [1, 1]} : vector<11x256xf32> to vector<1x256xf32>
    %40 = vector.broadcast %39 : vector<1x256xf32> to vector<16x256xf32>
    %41 = arith.mulf %38, %40 : vector<16x256xf32>
    %42 = arith.addf %31, %41 : vector<16x256xf32>
    %c3_i32 = arith.constant 3 : i32
    %43 = tpu.dynamic_rotate %19 by %c3_i32 dim 0 : vector<16x256xf32>, i32 -> vector<16x256xf32>
    %c3_i32_13 = arith.constant 3 : i32
    %44 = vector.broadcast %c3_i32_13 : i32 to vector<16x1xi32>
    %45 = arith.cmpi sge, %2, %44 : vector<16x1xi32>
    %cst_14 = arith.constant 0.000000e+00 : f32
    %46 = vector.shape_cast %45 : vector<16x1xi1> to vector<16x1xi1>
    %47 = vector.broadcast %46 : vector<16x1xi1> to vector<16x256xi1>
    %48 = vector.broadcast %cst_14 : f32 to vector<16x256xf32>
    %49 = arith.select %47, %43, %48 : vector<16x256xi1>, vector<16x256xf32>
    %50 = vector.extract_strided_slice %20 {offsets = [2, 0], sizes = [1, 256], strides = [1, 1]} : vector<11x256xf32> to vector<1x256xf32>
    %51 = vector.broadcast %50 : vector<1x256xf32> to vector<16x256xf32>
    %52 = arith.mulf %49, %51 : vector<16x256xf32>
    %53 = arith.addf %42, %52 : vector<16x256xf32>
    %c2_i32 = arith.constant 2 : i32
    %54 = tpu.dynamic_rotate %19 by %c2_i32 dim 0 : vector<16x256xf32>, i32 -> vector<16x256xf32>
    %c2_i32_15 = arith.constant 2 : i32
    %55 = vector.broadcast %c2_i32_15 : i32 to vector<16x1xi32>
    %56 = arith.cmpi sge, %2, %55 : vector<16x1xi32>
    %cst_16 = arith.constant 0.000000e+00 : f32
    %57 = vector.shape_cast %56 : vector<16x1xi1> to vector<16x1xi1>
    %58 = vector.broadcast %57 : vector<16x1xi1> to vector<16x256xi1>
    %59 = vector.broadcast %cst_16 : f32 to vector<16x256xf32>
    %60 = arith.select %58, %54, %59 : vector<16x256xi1>, vector<16x256xf32>
    %61 = vector.extract_strided_slice %20 {offsets = [3, 0], sizes = [1, 256], strides = [1, 1]} : vector<11x256xf32> to vector<1x256xf32>
    %62 = vector.broadcast %61 : vector<1x256xf32> to vector<16x256xf32>
    %63 = arith.mulf %60, %62 : vector<16x256xf32>
    %64 = arith.addf %53, %63 : vector<16x256xf32>
    %c1_i32 = arith.constant 1 : i32
    %65 = tpu.dynamic_rotate %19 by %c1_i32 dim 0 : vector<16x256xf32>, i32 -> vector<16x256xf32>
    %c1_i32_17 = arith.constant 1 : i32
    %66 = vector.broadcast %c1_i32_17 : i32 to vector<16x1xi32>
    %67 = arith.cmpi sge, %2, %66 : vector<16x1xi32>
    %cst_18 = arith.constant 0.000000e+00 : f32
    %68 = vector.shape_cast %67 : vector<16x1xi1> to vector<16x1xi1>
    %69 = vector.broadcast %68 : vector<16x1xi1> to vector<16x256xi1>
    %70 = vector.broadcast %cst_18 : f32 to vector<16x256xf32>
    %71 = arith.select %69, %65, %70 : vector<16x256xi1>, vector<16x256xf32>
    %72 = vector.extract_strided_slice %20 {offsets = [4, 0], sizes = [1, 256], strides = [1, 1]} : vector<11x256xf32> to vector<1x256xf32>
    %73 = vector.broadcast %72 : vector<1x256xf32> to vector<16x256xf32>
    %74 = arith.mulf %71, %73 : vector<16x256xf32>
    %75 = arith.addf %64, %74 : vector<16x256xf32>
    %76 = vector.extract_strided_slice %20 {offsets = [5, 0], sizes = [1, 256], strides = [1, 1]} : vector<11x256xf32> to vector<1x256xf32>
    %77 = vector.broadcast %76 : vector<1x256xf32> to vector<16x256xf32>
    %78 = arith.mulf %19, %77 : vector<16x256xf32>
    %79 = arith.addf %75, %78 : vector<16x256xf32>
    %c15_i32 = arith.constant 15 : i32
    %80 = tpu.dynamic_rotate %19 by %c15_i32 dim 0 : vector<16x256xf32>, i32 -> vector<16x256xf32>
    %c15_i32_19 = arith.constant 15 : i32
    %81 = vector.broadcast %c15_i32_19 : i32 to vector<16x1xi32>
    %82 = arith.cmpi slt, %2, %81 : vector<16x1xi32>
    %cst_20 = arith.constant 0.000000e+00 : f32
    %83 = vector.shape_cast %82 : vector<16x1xi1> to vector<16x1xi1>
    %84 = vector.broadcast %83 : vector<16x1xi1> to vector<16x256xi1>
    %85 = vector.broadcast %cst_20 : f32 to vector<16x256xf32>
    %86 = arith.select %84, %80, %85 : vector<16x256xi1>, vector<16x256xf32>
    %87 = vector.extract_strided_slice %20 {offsets = [6, 0], sizes = [1, 256], strides = [1, 1]} : vector<11x256xf32> to vector<1x256xf32>
    %88 = vector.broadcast %87 : vector<1x256xf32> to vector<16x256xf32>
    %89 = arith.mulf %86, %88 : vector<16x256xf32>
    %90 = arith.addf %79, %89 : vector<16x256xf32>
    %c14_i32 = arith.constant 14 : i32
    %91 = tpu.dynamic_rotate %19 by %c14_i32 dim 0 : vector<16x256xf32>, i32 -> vector<16x256xf32>
    %c14_i32_21 = arith.constant 14 : i32
    %92 = vector.broadcast %c14_i32_21 : i32 to vector<16x1xi32>
    %93 = arith.cmpi slt, %2, %92 : vector<16x1xi32>
    %cst_22 = arith.constant 0.000000e+00 : f32
    %94 = vector.shape_cast %93 : vector<16x1xi1> to vector<16x1xi1>
    %95 = vector.broadcast %94 : vector<16x1xi1> to vector<16x256xi1>
    %96 = vector.broadcast %cst_22 : f32 to vector<16x256xf32>
    %97 = arith.select %95, %91, %96 : vector<16x256xi1>, vector<16x256xf32>
    %98 = vector.extract_strided_slice %20 {offsets = [7, 0], sizes = [1, 256], strides = [1, 1]} : vector<11x256xf32> to vector<1x256xf32>
    %99 = vector.broadcast %98 : vector<1x256xf32> to vector<16x256xf32>
    %100 = arith.mulf %97, %99 : vector<16x256xf32>
    %101 = arith.addf %90, %100 : vector<16x256xf32>
    %c13_i32 = arith.constant 13 : i32
    %102 = tpu.dynamic_rotate %19 by %c13_i32 dim 0 : vector<16x256xf32>, i32 -> vector<16x256xf32>
    %c13_i32_23 = arith.constant 13 : i32
    %103 = vector.broadcast %c13_i32_23 : i32 to vector<16x1xi32>
    %104 = arith.cmpi slt, %2, %103 : vector<16x1xi32>
    %cst_24 = arith.constant 0.000000e+00 : f32
    %105 = vector.shape_cast %104 : vector<16x1xi1> to vector<16x1xi1>
    %106 = vector.broadcast %105 : vector<16x1xi1> to vector<16x256xi1>
    %107 = vector.broadcast %cst_24 : f32 to vector<16x256xf32>
    %108 = arith.select %106, %102, %107 : vector<16x256xi1>, vector<16x256xf32>
    %109 = vector.extract_strided_slice %20 {offsets = [8, 0], sizes = [1, 256], strides = [1, 1]} : vector<11x256xf32> to vector<1x256xf32>
    %110 = vector.broadcast %109 : vector<1x256xf32> to vector<16x256xf32>
    %111 = arith.mulf %108, %110 : vector<16x256xf32>
    %112 = arith.addf %101, %111 : vector<16x256xf32>
    %c12_i32 = arith.constant 12 : i32
    %113 = tpu.dynamic_rotate %19 by %c12_i32 dim 0 : vector<16x256xf32>, i32 -> vector<16x256xf32>
    %c12_i32_25 = arith.constant 12 : i32
    %114 = vector.broadcast %c12_i32_25 : i32 to vector<16x1xi32>
    %115 = arith.cmpi slt, %2, %114 : vector<16x1xi32>
    %cst_26 = arith.constant 0.000000e+00 : f32
    %116 = vector.shape_cast %115 : vector<16x1xi1> to vector<16x1xi1>
    %117 = vector.broadcast %116 : vector<16x1xi1> to vector<16x256xi1>
    %118 = vector.broadcast %cst_26 : f32 to vector<16x256xf32>
    %119 = arith.select %117, %113, %118 : vector<16x256xi1>, vector<16x256xf32>
    %120 = vector.extract_strided_slice %20 {offsets = [9, 0], sizes = [1, 256], strides = [1, 1]} : vector<11x256xf32> to vector<1x256xf32>
    %121 = vector.broadcast %120 : vector<1x256xf32> to vector<16x256xf32>
    %122 = arith.mulf %119, %121 : vector<16x256xf32>
    %123 = arith.addf %112, %122 : vector<16x256xf32>
    %c11_i32 = arith.constant 11 : i32
    %124 = tpu.dynamic_rotate %19 by %c11_i32 dim 0 : vector<16x256xf32>, i32 -> vector<16x256xf32>
    %c11_i32_27 = arith.constant 11 : i32
    %125 = vector.broadcast %c11_i32_27 : i32 to vector<16x1xi32>
    %126 = arith.cmpi slt, %2, %125 : vector<16x1xi32>
    %cst_28 = arith.constant 0.000000e+00 : f32
    %127 = vector.shape_cast %126 : vector<16x1xi1> to vector<16x1xi1>
    %128 = vector.broadcast %127 : vector<16x1xi1> to vector<16x256xi1>
    %129 = vector.broadcast %cst_28 : f32 to vector<16x256xf32>
    %130 = arith.select %128, %124, %129 : vector<16x256xi1>, vector<16x256xf32>
    %131 = vector.extract_strided_slice %20 {offsets = [10, 0], sizes = [1, 256], strides = [1, 1]} : vector<11x256xf32> to vector<1x256xf32>
    %132 = vector.broadcast %131 : vector<1x256xf32> to vector<16x256xf32>
    %133 = arith.mulf %130, %132 : vector<16x256xf32>
    %134 = arith.addf %123, %133 : vector<16x256xf32>
    %cst_29 = arith.constant 0.000000e+00 : f32
    %135 = vector.shape_cast %5 : vector<16x1xi1> to vector<16x1xi1>
    %136 = vector.broadcast %135 : vector<16x1xi1> to vector<16x256xi1>
    %137 = vector.broadcast %cst_29 : f32 to vector<16x256xf32>
    %138 = arith.select %136, %134, %137 : vector<16x256xi1>, vector<16x256xf32>
    %c0_30 = arith.constant 0 : index
    %c0_31 = arith.constant 0 : index
    %c0_32 = arith.constant 0 : index
    %139 = vector.load %arg8[%c0_30, %c0_31, %c0_32] : memref<1x16x256xf32, #tpu.memory_space<vmem>>, vector<1x16x256xf32>
    %140 = vector.shape_cast %139 : vector<1x16x256xf32> to vector<16x256xf32>
    %141 = vector.shape_cast %138 : vector<16x256xf32> to vector<1x16x256xf32>
    tpu.vector_store %arg8[%c0_30, %c0_31, %c0_32], %141 {strides = array<i32>} : memref<1x16x256xf32, #tpu.memory_space<vmem>>, vector<1x16x256xf32>,
    %cst_33 = arith.constant 0.0883883461 : f32
    %142 = vector.broadcast %cst_33 : f32 to vector<16x256xf32>
    %143 = arith.mulf %13, %142 : vector<16x256xf32>
    %144 = arith.truncf %143 : vector<16x256xf32> to vector<16x256xbf16>
    %c0_34 = arith.constant 0 : index
    %c0_35 = arith.constant 0 : index
    %145 = vector.load %arg9[%c0_34, %c0_35] : memref<16x256xbf16, #tpu.memory_space<vmem>>, vector<16x256xbf16>
    tpu.vector_store %arg9[%c0_34, %c0_35], %144 {strides = array<i32>} : memref<16x256xbf16, #tpu.memory_space<vmem>>, vector<16x256xbf16>,
    %146 = arith.truncf %14 : vector<16x256xf32> to vector<16x256xbf16>
    %c0_36 = arith.constant 0 : index
    %c0_37 = arith.constant 0 : index
    %147 = vector.load %arg10[%c0_36, %c0_37] : memref<16x256xbf16, #tpu.memory_space<vmem>>, vector<16x256xbf16>
    tpu.vector_store %arg10[%c0_36, %c0_37], %146 {strides = array<i32>} : memref<16x256xbf16, #tpu.memory_space<vmem>>, vector<16x256xbf16>,
    %148 = arith.truncf %15 : vector<16x256xf32> to vector<16x256xbf16>
    %c0_38 = arith.constant 0 : index
    %c0_39 = arith.constant 0 : index
    %149 = vector.load %arg11[%c0_38, %c0_39] : memref<16x256xbf16, #tpu.memory_space<vmem>>, vector<16x256xbf16>
    tpu.vector_store %arg11[%c0_38, %c0_39], %148 {strides = array<i32>} : memref<16x256xbf16, #tpu.memory_space<vmem>>, vector<16x256xbf16>,
    %150 = vector.broadcast %1 : i32 to vector<1x16xi32>
    %151 = arith.cmpi slt, %3, %150 : vector<1x16xi32>
    %cst_40 = arith.constant 0.000000e+00 : f32
    %cst_41 = arith.constant -1.000000e+30 : f32
    %152 = vector.broadcast %cst_40 : f32 to vector<1x16xf32>
    %153 = vector.broadcast %cst_41 : f32 to vector<1x16xf32>
    %154 = arith.select %151, %152, %153 : vector<1x16xi1>, vector<1x16xf32>
    %c0_i32 = arith.constant 0 : i32
    %c16_i32 = arith.constant 16 : i32
    %155 = arith.muli %c0_i32, %c16_i32 : i32
    %156 = tpu.assume_multiple %155, 16 : i32
    %cst_42 = arith.constant 0.000000e+00 : f32
    %157 = vector.broadcast %cst_42 : f32 to vector<16x256xf32>
    %158 = arith.index_cast %156 : i32 to index
    %c0_43 = arith.constant 0 : index
    %159 = vector.load %arg9[%158, %c0_43] : memref<16x256xbf16, #tpu.memory_space<vmem>>, vector<16x128xbf16>
    %c0_44 = arith.constant 0 : index
    %c0_45 = arith.constant 0 : index
    %160 = vector.load %arg10[%c0_44, %c0_45] : memref<16x256xbf16, #tpu.memory_space<vmem>>, vector<16x128xbf16>
    %cst_46 = arith.constant dense<0.000000e+00> : vector<16x16xf32>
    %161 = tpu.matmul %159, %160, %cst_46 {dimension_numbers = #tpu.dot_dimension_numbers<[1], [1], [0], [0], [0, 0, 1, 0], [], []>} : vector<16x128xbf16>, vector<16x128xbf16>, vector<16x16xf32> -> vector<16x16xf32>
    %162 = vector.broadcast %154 : vector<1x16xf32> to vector<16x16xf32>
    %163 = arith.addf %161, %162 : vector<16x16xf32>
    %cst_47 = arith.constant dense<0xFF800000> : vector<16xf32>
    %164 = vector.multi_reduction <maximumf>, %163, %cst_47 [1] : vector<16x16xf32> to vector<16xf32>
    %165 = vector.shape_cast %164 : vector<16xf32> to vector<16x1xf32>
    %166 = vector.broadcast %165 : vector<16x1xf32> to vector<16x16xf32>
    %167 = arith.subf %163, %166 : vector<16x16xf32>
    %168 = math.exp %167 : vector<16x16xf32>
    %cst_48 = arith.constant dense<0.000000e+00> : vector<16xf32>
    %169 = vector.multi_reduction <add>, %168, %cst_48 [1] : vector<16x16xf32> to vector<16xf32>
    %170 = vector.shape_cast %169 : vector<16xf32> to vector<16x1xf32>
    %cst_49 = arith.constant 1.000000e-30 : f32
    %171 = vector.broadcast %cst_49 : f32 to vector<16x1xf32>
    %172 = arith.maximumf %170, %171 : vector<16x1xf32>
    %173 = tpu.reciprocal %172 {approx = true} : vector<16x1xf32> -> vector<16x1xf32>
    %174 = vector.broadcast %173 : vector<16x1xf32> to vector<16x16xf32>
    %175 = arith.mulf %168, %174 : vector<16x16xf32>
    %176 = arith.truncf %175 : vector<16x16xf32> to vector<16x16xbf16>
    %c0_50 = arith.constant 0 : index
    %c0_51 = arith.constant 0 : index
    %177 = vector.load %arg11[%c0_50, %c0_51] : memref<16x256xbf16, #tpu.memory_space<vmem>>, vector<16x128xbf16>
    %cst_52 = arith.constant dense<0.000000e+00> : vector<16x128xf32>
    %178 = tpu.matmul %176, %177, %cst_52 {dimension_numbers = #tpu.dot_dimension_numbers<[1], [0], [0], [1], [0, 0, 1, 1], [], []>} : vector<16x16xbf16>, vector<16x128xbf16>, vector<16x128xf32> -> vector<16x128xf32>
    %179 = arith.truncf %178 : vector<16x128xf32> to vector<16x128xbf16>
    %c0_53 = arith.constant 0 : index
    %c0_54 = arith.constant 0 : index
    %180 = vector.load %arg6[%c0_53, %c0_54] : memref<256x256xbf16, #tpu.memory_space<vmem>>, vector<128x256xbf16>
    %cst_55 = arith.constant dense<0.000000e+00> : vector<16x256xf32>
    %181 = tpu.matmul %179, %180, %cst_55 {dimension_numbers = #tpu.dot_dimension_numbers<[1], [0], [0], [1], [0, 0, 1, 1], [], []>} : vector<16x128xbf16>, vector<128x256xbf16>, vector<16x256xf32> -> vector<16x256xf32>
    %182 = arith.addf %157, %181 : vector<16x256xf32>
    %183 = arith.index_cast %156 : i32 to index
    %c128 = arith.constant 128 : index
    %184 = vector.load %arg9[%183, %c128] : memref<16x256xbf16, #tpu.memory_space<vmem>>, vector<16x128xbf16>
    %c0_56 = arith.constant 0 : index
    %c128_57 = arith.constant 128 : index
    %185 = vector.load %arg10[%c0_56, %c128_57] : memref<16x256xbf16, #tpu.memory_space<vmem>>, vector<16x128xbf16>
    %cst_58 = arith.constant dense<0.000000e+00> : vector<16x16xf32>
    %186 = tpu.matmul %184, %185, %cst_58 {dimension_numbers = #tpu.dot_dimension_numbers<[1], [1], [0], [0], [0, 0, 1, 0], [], []>} : vector<16x128xbf16>, vector<16x128xbf16>, vector<16x16xf32> -> vector<16x16xf32>
    %187 = vector.broadcast %154 : vector<1x16xf32> to vector<16x16xf32>
    %188 = arith.addf %186, %187 : vector<16x16xf32>
    %cst_59 = arith.constant dense<0xFF800000> : vector<16xf32>
    %189 = vector.multi_reduction <maximumf>, %188, %cst_59 [1] : vector<16x16xf32> to vector<16xf32>
    %190 = vector.shape_cast %189 : vector<16xf32> to vector<16x1xf32>
    %191 = vector.broadcast %190 : vector<16x1xf32> to vector<16x16xf32>
    %192 = arith.subf %188, %191 : vector<16x16xf32>
    %193 = math.exp %192 : vector<16x16xf32>
    %cst_60 = arith.constant dense<0.000000e+00> : vector<16xf32>
    %194 = vector.multi_reduction <add>, %193, %cst_60 [1] : vector<16x16xf32> to vector<16xf32>
    %195 = vector.shape_cast %194 : vector<16xf32> to vector<16x1xf32>
    %cst_61 = arith.constant 1.000000e-30 : f32
    %196 = vector.broadcast %cst_61 : f32 to vector<16x1xf32>
    %197 = arith.maximumf %195, %196 : vector<16x1xf32>
    %198 = tpu.reciprocal %197 {approx = true} : vector<16x1xf32> -> vector<16x1xf32>
    %199 = vector.broadcast %198 : vector<16x1xf32> to vector<16x16xf32>
    %200 = arith.mulf %193, %199 : vector<16x16xf32>
    %201 = arith.truncf %200 : vector<16x16xf32> to vector<16x16xbf16>
    %c0_62 = arith.constant 0 : index
    %c128_63 = arith.constant 128 : index
    %202 = vector.load %arg11[%c0_62, %c128_63] : memref<16x256xbf16, #tpu.memory_space<vmem>>, vector<16x128xbf16>
    %cst_64 = arith.constant dense<0.000000e+00> : vector<16x128xf32>
    %203 = tpu.matmul %201, %202, %cst_64 {dimension_numbers = #tpu.dot_dimension_numbers<[1], [0], [0], [1], [0, 0, 1, 1], [], []>} : vector<16x16xbf16>, vector<16x128xbf16>, vector<16x128xf32> -> vector<16x128xf32>
    %204 = arith.truncf %203 : vector<16x128xf32> to vector<16x128xbf16>
    %c128_65 = arith.constant 128 : index
    %c0_66 = arith.constant 0 : index
    %205 = vector.load %arg6[%c128_65, %c0_66] : memref<256x256xbf16, #tpu.memory_space<vmem>>, vector<128x256xbf16>
    %cst_67 = arith.constant dense<0.000000e+00> : vector<16x256xf32>
    %206 = tpu.matmul %204, %205, %cst_67 {dimension_numbers = #tpu.dot_dimension_numbers<[1], [0], [0], [1], [0, 0, 1, 1], [], []>} : vector<16x128xbf16>, vector<128x256xbf16>, vector<16x256xf32> -> vector<16x256xf32>
    %207 = arith.addf %182, %206 : vector<16x256xf32>
    %c0_68 = arith.constant 0 : index
    %208 = arith.index_cast %156 : i32 to index
    %c0_69 = arith.constant 0 : index
    %209 = vector.load %arg8[%c0_68, %208, %c0_69] : memref<1x16x256xf32, #tpu.memory_space<vmem>>, vector<1x16x256xf32>
    %210 = vector.shape_cast %209 : vector<1x16x256xf32> to vector<16x256xf32>
    %211 = arith.addf %210, %207 : vector<16x256xf32>
    %c0_70 = arith.constant 0 : index
    %c0_71 = arith.constant 0 : index
    %212 = vector.load %arg7[%c0_70, %c0_71] : memref<1x256xf32, #tpu.memory_space<vmem>>, vector<1x256xf32>
    %213 = vector.broadcast %212 : vector<1x256xf32> to vector<16x256xf32>
    %214 = arith.addf %211, %213 : vector<16x256xf32>
    %c0_72 = arith.constant 0 : index
    %215 = arith.index_cast %156 : i32 to index
    %c0_73 = arith.constant 0 : index
    %216 = vector.load %arg8[%c0_72, %215, %c0_73] : memref<1x16x256xf32, #tpu.memory_space<vmem>>, vector<1x16x256xf32>
    %217 = vector.shape_cast %216 : vector<1x16x256xf32> to vector<16x256xf32>
    %218 = vector.shape_cast %214 : vector<16x256xf32> to vector<1x16x256xf32>
    tpu.vector_store %arg8[%c0_72, %215, %c0_73], %218 {strides = array<i32>} : memref<1x16x256xf32, #tpu.memory_space<vmem>>, vector<1x16x256xf32>,
    %c1_i32_74 = arith.constant 1 : i32
    return
  }
  func.func @transform_0(%arg0: i32, %arg1: memref<2xi32, #tpu.memory_space<smem>>) -> (i32, i32, i32) {
    %c0_i32 = arith.constant 0 : i32
    %c0_i32_0 = arith.constant 0 : i32
    %c0_i32_1 = arith.constant 0 : i32
    return %arg0, %c0_i32, %c0_i32_0 : i32, i32, i32
  }
  func.func @transform_1(%arg0: i32, %arg1: memref<2xi32, #tpu.memory_space<smem>>) -> (i32, i32) {
    %c0_i32 = arith.constant 0 : i32
    %c0_i32_0 = arith.constant 0 : i32
    %c0_i32_1 = arith.constant 0 : i32
    return %c0_i32, %c0_i32_0 : i32, i32
  }
  func.func @transform_2(%arg0: i32, %arg1: memref<2xi32, #tpu.memory_space<smem>>) -> (i32, i32) {
    %c0_i32 = arith.constant 0 : i32
    %c0_i32_0 = arith.constant 0 : i32
    %c0_i32_1 = arith.constant 0 : i32
    return %c0_i32, %c0_i32_0 : i32, i32
  }
  func.func @transform_3(%arg0: i32, %arg1: memref<2xi32, #tpu.memory_space<smem>>) -> (i32, i32) {
    %c0_i32 = arith.constant 0 : i32
    %c0_i32_0 = arith.constant 0 : i32
    %c0_i32_1 = arith.constant 0 : i32
    return %c0_i32, %c0_i32_0 : i32, i32
  }
  func.func @transform_4(%arg0: i32, %arg1: memref<2xi32, #tpu.memory_space<smem>>) -> (i32, i32) {
    %c0_i32 = arith.constant 0 : i32
    %c0_i32_0 = arith.constant 0 : i32
    %c0_i32_1 = arith.constant 0 : i32
    return %c0_i32, %c0_i32_0 : i32, i32
  }
  func.func @transform_5(%arg0: i32, %arg1: memref<2xi32, #tpu.memory_space<smem>>) -> (i32, i32) {
    %c0_i32 = arith.constant 0 : i32
    %c0_i32_0 = arith.constant 0 : i32
    %c0_i32_1 = arith.constant 0 : i32
    return %c0_i32, %c0_i32_0 : i32, i32
  }
  func.func @transform_6(%arg0: i32, %arg1: memref<2xi32, #tpu.memory_space<smem>>) -> (i32, i32, i32) {
    %c0_i32 = arith.constant 0 : i32
    %c0_i32_0 = arith.constant 0 : i32
    %c0_i32_1 = arith.constant 0 : i32
    return %arg0, %c0_i32, %c0_i32_0 : i32, i32, i32
  }
}

</mosaic_0001>

<llo_original>
// kernel: tpu_custom_call.1
$region0: #{tpu_custom_call.1}
  #allocation0 [shape = 'u32[]', space=smem, size = 0x4, offset = 0x4, fixed_abs, tag = 'smem constant byte address 0x4 - core index']
  #allocation1 [shape = 'u32[144,128]{1,0:T(1,128)}', space=vmem, size = 0x12000, scoped, tag = 'internal scratch']
  #allocation2 [shape = 'bf16[16,256]{1,0:T(16,128)(2,1)}', space=vmem, size = 0x2000, scoped, tag = 'scratch operand']
  #allocation3 [shape = 'bf16[16,256]{1,0:T(16,128)(2,1)}', space=vmem, size = 0x2000, scoped, tag = 'scratch operand']
  #allocation4 [shape = 'bf16[16,256]{1,0:T(16,128)(2,1)}', space=vmem, size = 0x2000, scoped, tag = 'scratch operand']
  #allocation5 [shape = 's32[1]{0}', space=sflag, size = 0x4, scoped, tag = 'scoped memory for tpu_custom_call.1']
  #allocation6 [shape = 'u8[512]{0}', space=smem, size = 0x200, scoped, tag = 'prefetched SMEM operand 0']
  %s0 = inlined_call_operand.hbm [shape: s32[2], index: 0, kind: input, shape index: {}]
  %s1 = inlined_call_operand.hbm [shape: bf16[2,16,256], index: 1, kind: input, shape index: {}]
  %s2 = inlined_call_operand.hbm [shape: bf16[256,768], index: 2, kind: input, shape index: {}]
  %s3 = inlined_call_operand.vmem [shape: f32[1,768], index: 3, kind: input, shape index: {}]
  %s4 = inlined_call_operand.hbm [shape: f32[11,256], index: 4, kind: input, shape index: {}]
  %s5 = inlined_call_operand.hbm [shape: bf16[256,256], index: 5, kind: input, shape index: {}]
  %s6 = inlined_call_operand.vmem [shape: f32[1,256], index: 6, kind: input, shape index: {}]
  %s7 = inlined_call_operand.hbm [shape: f32[2,16,256], index: 7, kind: output, shape index: {}]
  %s8 = sld [smem:[#allocation0]]
  $region73: #{tpu_custom_call.1} parent=0
    _
  %s10 = ssub.s32 1, %s8
  %s11 = scalar_select 0, %s10, %s8
  %13 = dma.hbm_to_smem %s0, 16, [#allocation6], [#allocation5]
  %14 = dma.done [#allocation5], 16
  %15 = sfence
  $region1: #{tpu_custom_call.1} parent=0
    #allocation7 [shape = 'u8[16384]{0}', space=vmem, size = 0x4000, scoped, tag = 'input window, operand 1']
    #allocation8 [shape = 's32[2]{0}', space=sflag, size = 0x8, scoped, tag = 'scoped memory for tpu_custom_call.1']
    #allocation9 [shape = 's32[2]{0}', space=sflag, size = 0x8, scoped, tag = 'scoped memory for tpu_custom_call.1']
    #allocation10 [shape = 'u8[393216]{0}', space=vmem, size = 0x60000, scoped, tag = 'input window, operand 2, single buffered']
    #allocation11 [shape = 's32[1]{0}', space=sflag, size = 0x4, scoped, tag = 'scoped memory for tpu_custom_call.1']
    #allocation12 [shape = 'u8[16384]{0}', space=vmem, size = 0x4000, scoped, tag = 'input window, operand 4, single buffered']
    #allocation13 [shape = 'u8[131072]{0}', space=vmem, size = 0x20000, scoped, tag = 'input window, operand 5, single buffered']
    #allocation14 [shape = 's32[1]{0}', space=sflag, size = 0x4, scoped, tag = 'scoped memory for tpu_custom_call.1']
    #allocation15 [shape = 'u8[32768]{0}', space=vmem, size = 0x8000, scoped, tag = 'output window, operand 0']
    %16 = vsyncpa [#allocation8], 0
    %s17 = scalar_lea.sflag [#allocation8], 1
    %18 = vsyncpa %s17, 0
    %19 = vsyncpa [#allocation11], 0
    %20 = vsyncpa [#allocation14], 0
    %21 = vsyncpa [#allocation9], 0
    %s22 = scalar_lea.sflag [#allocation9], 1
    %23 = vsyncpa %s22, 0
    loop: start=0, step=1, limit=4
    $region2: #{tpu_custom_call.1} parent=1 // loop_pre_header
      _
    $region3: #{tpu_custom_call.1} parent=1 // loop_header
      %s25 = sphi 0, %s29
      %p26 = scmp.ge.s32.totalorder %s25, 4
      %s35 = sphi 0, %s37
      %s38 = sphi 0, %s35
      %s39 = sphi 0, %s38
      %s55 = sphi 0, %s39
      %s59 = sphi 0, %s59
      %s61 = sphi 0, %s59
      %s62 = sphi 0, %s61
      %s76 = sphi 0, %s62
      %s80 = sphi 0, %s80
      %s82 = sphi 0, %s80
      %s83 = sphi 0, %s82
      %s97 = sphi 0, %s83
      %s101 = sphi 0, %s101
      %s103 = sphi 0, %s101
      %s104 = sphi 0, %s103
      %s118 = sphi 0, %s104
      %s122 = sphi 0, %s122
      %s124 = sphi 0, %s122
      %s125 = sphi 0, %s124
      %s139 = sphi 0, %s125
      %s143 = sphi 0, %s143
      %s145 = sphi 0, %s143
      %s146 = sphi 0, %s145
      %s160 = sphi 0, %s146
      %s166 = sphi 0, %s168
      %s169 = sphi 0, %s166
      %s170 = sphi 0, %s169
      %s186 = sphi 0, %s170
    $region4: #{tpu_custom_call.1} parent=1 // loop_header_branch
      %28 = sbr.rel (%p26) target = $region8
    $region5: #{tpu_custom_call.1} parent=1 // loop_body
      %s30 = ssub.s32 %s25, 1
      %s31 = ssub.s32 %s25, 2
      %s32 = sadd.s32 %s25, 1
      %s33 = ssub.s32 %s25, %s32
      %p34 = scmp.eq.s32.totalorder %s33, 0
      %s36 = sadd.s32 %s35, 1
      %s37 = scalar_select %p34, %s35, %s36
      %p40 = pneg %p34
      %p41 = scmp.eq.s32.totalorder %s25, 1
      %p42 = por %p40, %p41
      %p43 = scmp.ne.s32.totalorder %s35, %s38
      %p44 = scmp.eq.s32.totalorder %s25, 0
      %p45 = por %p43, %p44
      %p46 = scmp.ne.s32.totalorder %s35, %s38
      %p47 = scmp.eq.s32.totalorder %s30, 1
      %p48 = por %p46, %p47
      %p49 = scmp.ne.s32.totalorder %s38, %s39
      %p50 = scmp.eq.s32.totalorder %s30, 0
      %p51 = por %p49, %p50
      %p52 = scmp.ne.s32.totalorder %s38, %s39
      %p53 = scmp.eq.s32.totalorder %s31, 1
      %p54 = por %p52, %p53
      %p56 = scmp.ne.s32.totalorder %s39, %s55
      %p57 = scmp.eq.s32.totalorder %s31, 0
      %p58 = por %p56, %p57
      %s60 = sadd.s32 %s59, 1
      %p63 = scmp.eq.s32.totalorder %s25, 1
      %p64 = scmp.ne.s32.totalorder %s59, %s61
      %p65 = scmp.eq.s32.totalorder %s25, 0
      %p66 = por %p64, %p65
      %p67 = scmp.ne.s32.totalorder %s59, %s61
      %p68 = scmp.eq.s32.totalorder %s30, 1
      %p69 = por %p67, %p68
      %p70 = scmp.ne.s32.totalorder %s61, %s62
      %p71 = scmp.eq.s32.totalorder %s30, 0
      %p72 = por %p70, %p71
      %p73 = scmp.ne.s32.totalorder %s61, %s62
      %p74 = scmp.eq.s32.totalorder %s31, 1
      %p75 = por %p73, %p74
      %p77 = scmp.ne.s32.totalorder %s62, %s76
      %p78 = scmp.eq.s32.totalorder %s31, 0
      %p79 = por %p77, %p78
      %s81 = sadd.s32 %s80, 1
      %p84 = scmp.eq.s32.totalorder %s25, 1
      %p85 = scmp.ne.s32.totalorder %s80, %s82
      %p86 = scmp.eq.s32.totalorder %s25, 0
      %p87 = por %p85, %p86
      %p88 = scmp.ne.s32.totalorder %s80, %s82
      %p89 = scmp.eq.s32.totalorder %s30, 1
      %p90 = por %p88, %p89
      %p91 = scmp.ne.s32.totalorder %s82, %s83
      %p92 = scmp.eq.s32.totalorder %s30, 0
      %p93 = por %p91, %p92
      %p94 = scmp.ne.s32.totalorder %s82, %s83
      %p95 = scmp.eq.s32.totalorder %s31, 1
      %p96 = por %p94, %p95
      %p98 = scmp.ne.s32.totalorder %s83, %s97
      %p99 = scmp.eq.s32.totalorder %s31, 0
      %p100 = por %p98, %p99
      %s102 = sadd.s32 %s101, 1
      %p105 = scmp.eq.s32.totalorder %s25, 1
      %p106 = scmp.ne.s32.totalorder %s101, %s103
      %p107 = scmp.eq.s32.totalorder %s25, 0
      %p108 = por %p106, %p107
      %p109 = scmp.ne.s32.totalorder %s101, %s103
      %p110 = scmp.eq.s32.totalorder %s30, 1
      %p111 = por %p109, %p110
      %p112 = scmp.ne.s32.totalorder %s103, %s104
      %p113 = scmp.eq.s32.totalorder %s30, 0
      %p114 = por %p112, %p113
      %p115 = scmp.ne.s32.totalorder %s103, %s104
      %p116 = scmp.eq.s32.totalorder %s31, 1
      %p117 = por %p115, %p116
      %p119 = scmp.ne.s32.totalorder %s104, %s118
      %p120 = scmp.eq.s32.totalorder %s31, 0
      %p121 = por %p119, %p120
      %s123 = sadd.s32 %s122, 1
      %p126 = scmp.eq.s32.totalorder %s25, 1
      %p127 = scmp.ne.s32.totalorder %s122, %s124
      %p128 = scmp.eq.s32.totalorder %s25, 0
      %p129 = por %p127, %p128
      %p130 = scmp.ne.s32.totalorder %s122, %s124
      %p131 = scmp.eq.s32.totalorder %s30, 1
      %p132 = por %p130, %p131
      %p133 = scmp.ne.s32.totalorder %s124, %s125
      %p134 = scmp.eq.s32.totalorder %s30, 0
      %p135 = por %p133, %p134
      %p136 = scmp.ne.s32.totalorder %s124, %s125
      %p137 = scmp.eq.s32.totalorder %s31, 1
      %p138 = por %p136, %p137
      %p140 = scmp.ne.s32.totalorder %s125, %s139
      %p141 = scmp.eq.s32.totalorder %s31, 0
      %p142 = por %p140, %p141
      %s144 = sadd.s32 %s143, 1
      %p147 = scmp.eq.s32.totalorder %s25, 1
      %p148 = scmp.ne.s32.totalorder %s143, %s145
      %p149 = scmp.eq.s32.totalorder %s25, 0
      %p150 = por %p148, %p149
      %p151 = scmp.ne.s32.totalorder %s143, %s145
      %p152 = scmp.eq.s32.totalorder %s30, 1
      %p153 = por %p151, %p152
      %p154 = scmp.ne.s32.totalorder %s145, %s146
      %p155 = scmp.eq.s32.totalorder %s30, 0
      %p156 = por %p154, %p155
      %p157 = scmp.ne.s32.totalorder %s145, %s146
      %p158 = scmp.eq.s32.totalorder %s31, 1
      %p159 = por %p157, %p158
      %p161 = scmp.ne.s32.totalorder %s146, %s160
      %p162 = scmp.eq.s32.totalorder %s31, 0
      %p163 = por %p161, %p162
      %s164 = ssub.s32 %s25, %s32
      %p165 = scmp.eq.s32.totalorder %s164, 0
      %s167 = sadd.s32 %s166, 1
      %s168 = scalar_select %p165, %s166, %s167
      %p171 = pneg %p165
      %p172 = scmp.eq.s32.totalorder %s25, 1
      %p173 = por %p171, %p172
      %p174 = scmp.ne.s32.totalorder %s166, %s169
      %p175 = scmp.eq.s32.totalorder %s25, 0
      %p176 = por %p174, %p175
      %p177 = scmp.ne.s32.totalorder %s166, %s169
      %p178 = scmp.eq.s32.totalorder %s30, 1
      %p179 = por %p177, %p178
      %p180 = scmp.ne.s32.totalorder %s169, %s170
      %p181 = scmp.eq.s32.totalorder %s30, 0
      %p182 = por %p180, %p181
      %p183 = scmp.ne.s32.totalorder %s169, %s170
      %p184 = scmp.eq.s32.totalorder %s31, 1
      %p185 = por %p183, %p184
      %p187 = scmp.ne.s32.totalorder %s170, %s186
      %p188 = scmp.eq.s32.totalorder %s31, 0
      %p189 = por %p187, %p188
      %p190 = scmp.le.s32.totalorder 1, %s25
      %p191 = scmp.lt.s32.totalorder %s25, 3
      %p192 = pnand %p190, %p191
      %p193 = pneg %p192
      // Predicated region
      $region9: #{tpu_custom_call.1} parent=5 // pred_check
        _
      $region10: #{tpu_custom_call.1} parent=5 // pred_check_branch
        %195 = sbr.rel (%p192) target = $region12
      $region11: #{tpu_custom_call.1} parent=5 // pred_region
        %s196 = ssub.s32 %s25, 1
        // Predicated region
        $region13: #{tpu_custom_call.1} parent=11 // pred_check
          %p197 = pneg %p72
        $region14: #{tpu_custom_call.1} parent=11 // pred_check_branch
          %199 = sbr.rel (%p197) target = $region16
        $region15: #{tpu_custom_call.1} parent=11 // pred_region
          %s201 = ssub.s32 12288, 12288
          %202 = vsyncadd [#allocation11], %s201
          %s203 = sshll.u32 [#allocation10], 4
          %s204 = int_to_ptr.vmem [resolvable:$true] %s203
          %209 = dma.hbm_to_vmem [thread:$0]  %s2, 12288, %s204, [#allocation11], 384, 384, 24
        $region16: #{tpu_custom_call.1} parent=11 // pred_fallthru
          _
        // Predicated region
        $region17: #{tpu_custom_call.1} parent=11 // pred_check
          %p210 = pneg %p93
        $region18: #{tpu_custom_call.1} parent=11 // pred_check_branch
          %212 = sbr.rel (%p210) target = $region20
        $region19: #{tpu_custom_call.1} parent=11 // pred_region
          _
        $region20: #{tpu_custom_call.1} parent=11 // pred_fallthru
          _
        // Predicated region
        $region21: #{tpu_custom_call.1} parent=11 // pred_check
          %p213 = pneg %p114
        $region22: #{tpu_custom_call.1} parent=11 // pred_check_branch
          %215 = sbr.rel (%p213) target = $region24
        $region23: #{tpu_custom_call.1} parent=11 // pred_region
          %s217 = ssub.s32 512, 512
          %218 = vsyncadd [#allocation11], %s217
          %s219 = sshll.u32 [#allocation12], 4
          %s220 = int_to_ptr.vmem [resolvable:$true] %s219
          %225 = dma.hbm_to_vmem [thread:$0]  %s4, 512, %s220, [#allocation11], 256, 256, 16
        $region24: #{tpu_custom_call.1} parent=11 // pred_fallthru
          _
        // Predicated region
        $region25: #{tpu_custom_call.1} parent=11 // pred_check
          %p226 = pneg %p135
        $region26: #{tpu_custom_call.1} parent=11 // pred_check_branch
          %228 = sbr.rel (%p226) target = $region28
        $region27: #{tpu_custom_call.1} parent=11 // pred_region
          %s230 = ssub.s32 4096, 4096
          %231 = vsyncadd [#allocation14], %s230
          %s232 = sshll.u32 [#allocation13], 4
          %s233 = int_to_ptr.vmem [resolvable:$true] %s232
          %238 = dma.hbm_to_vmem [thread:$0]  %s5, 4096, %s233, [#allocation14], 128, 128, 8
        $region28: #{tpu_custom_call.1} parent=11 // pred_fallthru
          _
        // Predicated region
        $region29: #{tpu_custom_call.1} parent=11 // pred_check
          %p239 = pneg %p156
        $region30: #{tpu_custom_call.1} parent=11 // pred_check_branch
          %241 = sbr.rel (%p239) target = $region32
        $region31: #{tpu_custom_call.1} parent=11 // pred_region
          _
        $region32: #{tpu_custom_call.1} parent=11 // pred_fallthru
          _
      $region12: #{tpu_custom_call.1} parent=5 // pred_fallthru
        _
      %p242 = scmp.lt.s32.totalorder %s25, 2
      // Predicated region
      $region33: #{tpu_custom_call.1} parent=5 // pred_check
        %p243 = pneg %p242
      $region34: #{tpu_custom_call.1} parent=5 // pred_check_branch
        %245 = sbr.rel (%p243) target = $region36
      $region35: #{tpu_custom_call.1} parent=5 // pred_region
        // Predicated region
        $region37: #{tpu_custom_call.1} parent=35 // pred_check
          %p246 = pneg %p45
        $region38: #{tpu_custom_call.1} parent=35 // pred_check_branch
          %248 = sbr.rel (%p246) target = $region40
        $region39: #{tpu_custom_call.1} parent=35 // pred_region
          %s249 = sand.u32 %s35, 1
          %s250 = scalar_lea.sflag [#allocation8], %s249
          %s251 = sand.u32 %s35, 1
          %s252 = smul.addr %s251, 16
          %s253 = scalar_lea.vmem [#allocation7], %s252
          %s255 = ssub.s32 256, 256
          %256 = vsyncadd %s250, %s255
          %s257 = smul.addr %s25, 4
          %s258 = smul.addr %s257, 64
          %s259 = scalar_lea.hbm %s1, %s258
          %s260 = sshll.u32 %s253, 4
          %s261 = int_to_ptr.vmem [resolvable:$true] %s260
          %266 = dma.hbm_to_vmem [thread:$0]  %s259, 256, %s261, %s250, 128, 128, 8
        $region40: #{tpu_custom_call.1} parent=35 // pred_fallthru
          _
      $region36: #{tpu_custom_call.1} parent=5 // pred_fallthru
        _
      %p267 = scmp.le.s32.totalorder 1, %s25
      %p268 = scmp.lt.s32.totalorder %s25, 3
      %p269 = pnand %p267, %p268
      %p270 = pneg %p269
      // Predicated region
      $region41: #{tpu_custom_call.1} parent=5 // pred_check
        _
      $region42: #{tpu_custom_call.1} parent=5 // pred_check_branch
        %272 = sbr.rel (%p269) target = $region44
      $region43: #{tpu_custom_call.1} parent=5 // pred_region
        %s273 = ssub.s32 %s25, 1
        %s274 = sand.u32 %s38, 1
        %s275 = scalar_lea.sflag [#allocation8], %s274
        %s276 = sand.u32 %s38, 1
        %s277 = smul.addr %s276, 16
        %s278 = scalar_lea.vmem [#allocation7], %s277
        // Predicated region
        $region45: #{tpu_custom_call.1} parent=43 // pred_check
          %p279 = pneg %p51
        $region46: #{tpu_custom_call.1} parent=43 // pred_check_branch
          %281 = sbr.rel (%p279) target = $region48
        $region47: #{tpu_custom_call.1} parent=43 // pred_region
          %282 = dma.done %s275, 256
        $region48: #{tpu_custom_call.1} parent=43 // pred_fallthru
          _
        // Predicated region
        $region49: #{tpu_custom_call.1} parent=43 // pred_check
          %p283 = pneg %p72
        $region50: #{tpu_custom_call.1} parent=43 // pred_check_branch
          %285 = sbr.rel (%p283) target = $region52
        $region51: #{tpu_custom_call.1} parent=43 // pred_region
          %286 = dma.done [#allocation11], 12288
        $region52: #{tpu_custom_call.1} parent=43 // pred_fallthru
          _
        // Predicated region
        $region53: #{tpu_custom_call.1} parent=43 // pred_check
          %p287 = pneg %p114
        $region54: #{tpu_custom_call.1} parent=43 // pred_check_branch
          %289 = sbr.rel (%p287) target = $region56
        $region55: #{tpu_custom_call.1} parent=43 // pred_region
          %290 = dma.done [#allocation11], 512
        $region56: #{tpu_custom_call.1} parent=43 // pred_fallthru
          _
        // Predicated region
        $region57: #{tpu_custom_call.1} parent=43 // pred_check
          %p291 = pneg %p135
        $region58: #{tpu_custom_call.1} parent=43 // pred_check_branch
          %293 = sbr.rel (%p291) target = $region60
        $region59: #{tpu_custom_call.1} parent=43 // pred_region
          %294 = dma.done [#allocation14], 4096
        $region60: #{tpu_custom_call.1} parent=43 // pred_fallthru
          _
        %s295 = sand.u32 %s38, 1
        %s296 = scalar_lea.sflag [#allocation8], %s295
        %s297 = sand.u32 %s38, 1
        %s298 = smul.addr %s297, 16
        %s299 = scalar_lea.vmem [#allocation7], %s298
        %p300 = pneg %p51
        %p301 = pneg %p48
        %p302 = pneg %p72
        %p303 = pneg %p69
        %p304 = pneg %p93
        %p305 = pneg %p90
        %p306 = pneg %p114
        %p307 = pneg %p111
        %p308 = pneg %p135
        %p309 = pneg %p132
        %p310 = pneg %p156
        %p311 = pneg %p153
        %p312 = pneg %p182
        %p313 = pneg %p179
        %s314 = sand.u32 %s169, 1
        %s315 = scalar_lea.sflag [#allocation9], %s314
        %s316 = sand.u32 %s169, 1
        %s317 = smul.addr %s316, 32
        %s318 = scalar_lea.vmem [#allocation15], %s317
        %s320 = sld [smem:[#allocation6 + %s30]]
        %v321 = vlaneseq
        %v322 = vshrl.u32 %v321, 7
        %v323 = vadd.s32 %v322, 8
        %v324 = vlaneseq
        %v325 = vand.u32 %v324, 127
        %v326 = vstv %s320
        %vm327 = vcmp.lt.s32.totalorder %v322, %v326
        %vm328 = vcmp.lt.s32.totalorder %v323, %v326
        %v329 = vld [vmem:[%s278] sm:$0xff]
        %v330 = vld [vmem:[%s278 + $0x8] sm:$0xff]
        %v331 = vld [vmem:[#allocation10] sm:$0xff]
        %v332 = vld [vmem:[#allocation10 + $0x8] sm:$0xff]
        %v333 = vld [vmem:[#allocation10 + $0x10] sm:$0xff]
        %v334 = vld [vmem:[#allocation10 + $0x18] sm:$0xff]
        %v335 = vld [vmem:[#allocation10 + $0x20] sm:$0xff]
        %v336 = vld [vmem:[#allocation10 + $0x28] sm:$0xff]
        %v337 = vld [vmem:[#allocation10 + $0x30] sm:$0xff]
        %v338 = vld [vmem:[#allocation10 + $0x38] sm:$0xff]
        %v339 = vld [vmem:[#allocation10 + $0x40] sm:$0xff]
        %v340 = vld [vmem:[#allocation10 + $0x48] sm:$0xff]
        %v341 = vld [vmem:[#allocation10 + $0x50] sm:$0xff]
        %v342 = vld [vmem:[#allocation10 + $0x58] sm:$0xff]
        %v343 = vld [vmem:[#allocation10 + $0x60] sm:$0xff]
        %v344 = vld [vmem:[#allocation10 + $0x68] sm:$0xff]
        %v345 = vld [vmem:[#allocation10 + $0x70] sm:$0xff]
        %v346 = vld [vmem:[#allocation10 + $0x78] sm:$0xff]
        %v347 = vld [vmem:[#allocation10 + $0x80] sm:$0xff]
        %v348 = vld [vmem:[#allocation10 + $0x88] sm:$0xff]
        %v349 = vld [vmem:[#allocation10 + $0x90] sm:$0xff]
        %v350 = vld [vmem:[#allocation10 + $0x98] sm:$0xff]
        %v351 = vld [vmem:[#allocation10 + $0xa0] sm:$0xff]
        %v352 = vld [vmem:[#allocation10 + $0xa8] sm:$0xff]
        %v353 = vld [vmem:[#allocation10 + $0xb0] sm:$0xff]
        %v354 = vld [vmem:[#allocation10 + $0xb8] sm:$0xff]
        %v355 = vld [vmem:[#allocation10 + $0xc0] sm:$0xff]
        %v356 = vld [vmem:[#allocation10 + $0xc8] sm:$0xff]
        %v357 = vld [vmem:[#allocation10 + $0xd0] sm:$0xff]
        %v358 = vld [vmem:[#allocation10 + $0xd8] sm:$0xff]
        %v359 = vld [vmem:[#allocation10 + $0xe0] sm:$0xff]
        %v360 = vld [vmem:[#allocation10 + $0xe8] sm:$0xff]
        %v361 = vld [vmem:[#allocation10 + $0xf0] sm:$0xff]
        %v362 = vld [vmem:[#allocation10 + $0xf8] sm:$0xff]
        %v363 = vld [vmem:[#allocation10 + $0x100] sm:$0xff]
        %v364 = vld [vmem:[#allocation10 + $0x108] sm:$0xff]
        %v365 = vld [vmem:[#allocation10 + $0x110] sm:$0xff]
        %v366 = vld [vmem:[#allocation10 + $0x118] sm:$0xff]
        %v367 = vld [vmem:[#allocation10 + $0x120] sm:$0xff]
        %v368 = vld [vmem:[#allocation10 + $0x128] sm:$0xff]
        %v369 = vld [vmem:[#allocation10 + $0x130] sm:$0xff]
        %v370 = vld [vmem:[#allocation10 + $0x138] sm:$0xff]
        %v371 = vld [vmem:[#allocation10 + $0x140] sm:$0xff]
        %v372 = vld [vmem:[#allocation10 + $0x148] sm:$0xff]
        %v373 = vld [vmem:[#allocation10 + $0x150] sm:$0xff]
        %v374 = vld [vmem:[#allocation10 + $0x158] sm:$0xff]
        %v375 = vld [vmem:[#allocation10 + $0x160] sm:$0xff]
        %v376 = vld [vmem:[#allocation10 + $0x168] sm:$0xff]
        %v377 = vld [vmem:[#allocation10 + $0x170] sm:$0xff]
        %v378 = vld [vmem:[#allocation10 + $0x178] sm:$0xff]
        %v379 = vld [vmem:[#allocation10 + $0x180] sm:$0xff]
        %v380 = vld [vmem:[#allocation10 + $0x188] sm:$0xff]
        %v381 = vld [vmem:[#allocation10 + $0x190] sm:$0xff]
        %v382 = vld [vmem:[#allocation10 + $0x198] sm:$0xff]
        %v383 = vld [vmem:[#allocation10 + $0x1a0] sm:$0xff]
        %v384 = vld [vmem:[#allocation10 + $0x1a8] sm:$0xff]
        %v385 = vld [vmem:[#allocation10 + $0x1b0] sm:$0xff]
        %v386 = vld [vmem:[#allocation10 + $0x1b8] sm:$0xff]
        %v387 = vld [vmem:[#allocation10 + $0x1c0] sm:$0xff]
        %v388 = vld [vmem:[#allocation10 + $0x1c8] sm:$0xff]
        %v389 = vld [vmem:[#allocation10 + $0x1d0] sm:$0xff]
        %v390 = vld [vmem:[#allocation10 + $0x1d8] sm:$0xff]
        %v391 = vld [vmem:[#allocation10 + $0x1e0] sm:$0xff]
        %v392 = vld [vmem:[#allocation10 + $0x1e8] sm:$0xff]
        %v393 = vld [vmem:[#allocation10 + $0x1f0] sm:$0xff]
        %v394 = vld [vmem:[#allocation10 + $0x1f8] sm:$0xff]
        %v395 = vld [vmem:[#allocation10 + $0x200] sm:$0xff]
        %v396 = vld [vmem:[#allocation10 + $0x208] sm:$0xff]
        %v397 = vld [vmem:[#allocation10 + $0x210] sm:$0xff]
        %v398 = vld [vmem:[#allocation10 + $0x218] sm:$0xff]
        %v399 = vld [vmem:[#allocation10 + $0x220] sm:$0xff]
        %v400 = vld [vmem:[#allocation10 + $0x228] sm:$0xff]
        %v401 = vld [vmem:[#allocation10 + $0x230] sm:$0xff]
        %v402 = vld [vmem:[#allocation10 + $0x238] sm:$0xff]
        %v403 = vld [vmem:[#allocation10 + $0x240] sm:$0xff]
        %v404 = vld [vmem:[#allocation10 + $0x248] sm:$0xff]
        %v405 = vld [vmem:[#allocation10 + $0x250] sm:$0xff]
        %v406 = vld [vmem:[#allocation10 + $0x258] sm:$0xff]
        %v407 = vld [vmem:[#allocation10 + $0x260] sm:$0xff]
        %v408 = vld [vmem:[#allocation10 + $0x268] sm:$0xff]
        %v409 = vld [vmem:[#allocation10 + $0x270] sm:$0xff]
        %v410 = vld [vmem:[#allocation10 + $0x278] sm:$0xff]
        %v411 = vld [vmem:[#allocation10 + $0x280] sm:$0xff]
        %v412 = vld [vmem:[#allocation10 + $0x288] sm:$0xff]
        %v413 = vld [vmem:[#allocation10 + $0x290] sm:$0xff]
        %v414 = vld [vmem:[#allocation10 + $0x298] sm:$0xff]
        %v415 = vld [vmem:[#allocation10 + $0x2a0] sm:$0xff]
        %v416 = vld [vmem:[#allocation10 + $0x2a8] sm:$0xff]
        %v417 = vld [vmem:[#allocation10 + $0x2b0] sm:$0xff]
        %v418 = vld [vmem:[#allocation10 + $0x2b8] sm:$0xff]
        %v419 = vld [vmem:[#allocation10 + $0x2c0] sm:$0xff]
        %v420 = vld [vmem:[#allocation10 + $0x2c8] sm:$0xff]
        %v421 = vld [vmem:[#allocation10 + $0x2d0] sm:$0xff]
        %v422 = vld [vmem:[#allocation10 + $0x2d8] sm:$0xff]
        %v423 = vld [vmem:[#allocation10 + $0x2e0] sm:$0xff]
        %v424 = vld [vmem:[#allocation10 + $0x2e8] sm:$0xff]
        %v425 = vld [vmem:[#allocation10 + $0x2f0] sm:$0xff]
        %v426 = vld [vmem:[#allocation10 + $0x2f8] sm:$0xff]
        %v427 = vld [vmem:[%s3] sm:$0x3f]
        %v429 = vlaneseq
        %v430 = vshrl.u32 %v429, 7
        %v431 = vsub.s32 0, %v430
        %v432 = vrot.slane %v427, %v431
        %v433 = vlaneseq
        %v434 = vshrl.u32 %v433, 7
        %v435 = vsub.s32 1, %v434
        %v436 = vrot.slane %v427, %v435
        %v437 = vlaneseq
        %v438 = vshrl.u32 %v437, 7
        %v439 = vsub.s32 2, %v438
        %v440 = vrot.slane %v427, %v439
        %v441 = vlaneseq
        %v442 = vshrl.u32 %v441, 7
        %v443 = vsub.s32 3, %v442
        %v444 = vrot.slane %v427, %v443
        %v445 = vlaneseq
        %v446 = vshrl.u32 %v445, 7
        %v447 = vsub.s32 4, %v446
        %v448 = vrot.slane %v427, %v447
        %v449 = vlaneseq
        %v450 = vshrl.u32 %v449, 7
        %v451 = vsub.s32 5, %v450
        %v452 = vrot.slane %v427, %v451
        %v461 = vunpack.c.l.b16 %v329
        %v462 = vunpack.c.h.b16 %v329
        %v463 = vunpack.c.l.b16 %v330
        %v464 = vunpack.c.h.b16 %v330
        %v465 = vpack.c.b16 %v463, %v461
        %v466 = vpack.c.b16 %v464, %v462
        %v565 = vunpack.c.l.b16 %v331
        %v566 = vunpack.c.h.b16 %v331
        %v567 = vunpack.c.l.b16 %v332
        %v568 = vunpack.c.h.b16 %v332
        %v569 = vunpack.c.l.b16 %v333
        %v570 = vunpack.c.h.b16 %v333
        %v571 = vunpack.c.l.b16 %v334
        %v572 = vunpack.c.h.b16 %v334
        %v573 = vunpack.c.l.b16 %v335
        %v574 = vunpack.c.h.b16 %v335
        %v575 = vunpack.c.l.b16 %v336
        %v576 = vunpack.c.h.b16 %v336
        %v577 = vunpack.c.l.b16 %v337
        %v578 = vunpack.c.h.b16 %v337
        %v579 = vunpack.c.l.b16 %v338
        %v580 = vunpack.c.h.b16 %v338
        %v581 = vunpack.c.l.b16 %v339
        %v582 = vunpack.c.h.b16 %v339
        %v583 = vunpack.c.l.b16 %v340
        %v584 = vunpack.c.h.b16 %v340
        %v585 = vunpack.c.l.b16 %v341
        %v586 = vunpack.c.h.b16 %v341
        %v587 = vunpack.c.l.b16 %v342
        %v588 = vunpack.c.h.b16 %v342
        %v589 = vunpack.c.l.b16 %v343
        %v590 = vunpack.c.h.b16 %v343
        %v591 = vunpack.c.l.b16 %v344
        %v592 = vunpack.c.h.b16 %v344
        %v593 = vunpack.c.l.b16 %v345
        %v594 = vunpack.c.h.b16 %v345
        %v595 = vunpack.c.l.b16 %v346
        %v596 = vunpack.c.h.b16 %v346
        %v597 = vunpack.c.l.b16 %v347
        %v598 = vunpack.c.h.b16 %v347
        %v599 = vunpack.c.l.b16 %v348
        %v600 = vunpack.c.h.b16 %v348
        %v601 = vunpack.c.l.b16 %v349
        %v602 = vunpack.c.h.b16 %v349
        %v603 = vunpack.c.l.b16 %v350
        %v604 = vunpack.c.h.b16 %v350
        %v605 = vunpack.c.l.b16 %v351
        %v606 = vunpack.c.h.b16 %v351
        %v607 = vunpack.c.l.b16 %v352
        %v608 = vunpack.c.h.b16 %v352
        %v609 = vunpack.c.l.b16 %v353
        %v610 = vunpack.c.h.b16 %v353
        %v611 = vunpack.c.l.b16 %v354
        %v612 = vunpack.c.h.b16 %v354
        %v613 = vunpack.c.l.b16 %v355
        %v614 = vunpack.c.h.b16 %v355
        %v615 = vunpack.c.l.b16 %v356
        %v616 = vunpack.c.h.b16 %v356
        %v617 = vunpack.c.l.b16 %v357
        %v618 = vunpack.c.h.b16 %v357
        %v619 = vunpack.c.l.b16 %v358
        %v620 = vunpack.c.h.b16 %v358
        %v621 = vunpack.c.l.b16 %v359
        %v622 = vunpack.c.h.b16 %v359
        %v623 = vunpack.c.l.b16 %v360
        %v624 = vunpack.c.h.b16 %v360
        %v625 = vunpack.c.l.b16 %v361
        %v626 = vunpack.c.h.b16 %v361
        %v627 = vunpack.c.l.b16 %v362
        %v628 = vunpack.c.h.b16 %v362
        %v629 = vunpack.c.l.b16 %v363
        %v630 = vunpack.c.h.b16 %v363
        %v631 = vunpack.c.l.b16 %v364
        %v632 = vunpack.c.h.b16 %v364
        %v633 = vunpack.c.l.b16 %v365
        %v634 = vunpack.c.h.b16 %v365
        %v635 = vunpack.c.l.b16 %v366
        %v636 = vunpack.c.h.b16 %v366
        %v637 = vunpack.c.l.b16 %v367
        %v638 = vunpack.c.h.b16 %v367
        %v639 = vunpack.c.l.b16 %v368
        %v640 = vunpack.c.h.b16 %v368
        %v641 = vunpack.c.l.b16 %v369
        %v642 = vunpack.c.h.b16 %v369
        %v643 = vunpack.c.l.b16 %v370
        %v644 = vunpack.c.h.b16 %v370
        %v645 = vunpack.c.l.b16 %v371
        %v646 = vunpack.c.h.b16 %v371
        %v647 = vunpack.c.l.b16 %v372
        %v648 = vunpack.c.h.b16 %v372
        %v649 = vunpack.c.l.b16 %v373
        %v650 = vunpack.c.h.b16 %v373
        %v651 = vunpack.c.l.b16 %v374
        %v652 = vunpack.c.h.b16 %v374
        %v653 = vunpack.c.l.b16 %v375
        %v654 = vunpack.c.h.b16 %v375
        %v655 = vunpack.c.l.b16 %v376
        %v656 = vunpack.c.h.b16 %v376
        %v657 = vunpack.c.l.b16 %v377
        %v658 = vunpack.c.h.b16 %v377
        %v659 = vunpack.c.l.b16 %v378
        %v660 = vunpack.c.h.b16 %v378
        %v661 = vunpack.c.l.b16 %v379
        %v662 = vunpack.c.h.b16 %v379
        %v663 = vunpack.c.l.b16 %v380
        %v664 = vunpack.c.h.b16 %v380
        %v665 = vunpack.c.l.b16 %v381
        %v666 = vunpack.c.h.b16 %v381
        %v667 = vunpack.c.l.b16 %v382
        %v668 = vunpack.c.h.b16 %v382
        %v669 = vunpack.c.l.b16 %v383
        %v670 = vunpack.c.h.b16 %v383
        %v671 = vunpack.c.l.b16 %v384
        %v672 = vunpack.c.h.b16 %v384
        %v673 = vunpack.c.l.b16 %v385
        %v674 = vunpack.c.h.b16 %v385
        %v675 = vunpack.c.l.b16 %v386
        %v676 = vunpack.c.h.b16 %v386
        %v677 = vunpack.c.l.b16 %v387
        %v678 = vunpack.c.h.b16 %v387
        %v679 = vunpack.c.l.b16 %v388
        %v680 = vunpack.c.h.b16 %v388
        %v681 = vunpack.c.l.b16 %v389
        %v682 = vunpack.c.h.b16 %v389
        %v683 = vunpack.c.l.b16 %v390
        %v684 = vunpack.c.h.b16 %v390
        %v685 = vunpack.c.l.b16 %v391
        %v686 = vunpack.c.h.b16 %v391
        %v687 = vunpack.c.l.b16 %v392
        %v688 = vunpack.c.h.b16 %v392
        %v689 = vunpack.c.l.b16 %v393
        %v690 = vunpack.c.h.b16 %v393
        %v691 = vunpack.c.l.b16 %v394
        %v692 = vunpack.c.h.b16 %v394
        %v693 = vunpack.c.l.b16 %v395
        %v694 = vunpack.c.h.b16 %v395
        %v695 = vunpack.c.l.b16 %v396
        %v696 = vunpack.c.h.b16 %v396
        %v697 = vunpack.c.l.b16 %v397
        %v698 = vunpack.c.h.b16 %v397
        %v699 = vunpack.c.l.b16 %v398
        %v700 = vunpack.c.h.b16 %v398
        %v701 = vunpack.c.l.b16 %v399
        %v702 = vunpack.c.h.b16 %v399
        %v703 = vunpack.c.l.b16 %v400
        %v704 = vunpack.c.h.b16 %v400
        %v705 = vunpack.c.l.b16 %v401
        %v706 = vunpack.c.h.b16 %v401
        %v707 = vunpack.c.l.b16 %v402
        %v708 = vunpack.c.h.b16 %v402
        %v709 = vunpack.c.l.b16 %v403
        %v710 = vunpack.c.h.b16 %v403
        %v711 = vunpack.c.l.b16 %v404
        %v712 = vunpack.c.h.b16 %v404
        %v713 = vunpack.c.l.b16 %v405
        %v714 = vunpack.c.h.b16 %v405
        %v715 = vunpack.c.l.b16 %v406
        %v716 = vunpack.c.h.b16 %v406
        %v717 = vunpack.c.l.b16 %v407
        %v718 = vunpack.c.h.b16 %v407
        %v719 = vunpack.c.l.b16 %v408
        %v720 = vunpack.c.h.b16 %v408
        %v721 = vunpack.c.l.b16 %v409
        %v722 = vunpack.c.h.b16 %v409
        %v723 = vunpack.c.l.b16 %v410
        %v724 = vunpack.c.h.b16 %v410
        %v725 = vunpack.c.l.b16 %v411
        %v726 = vunpack.c.h.b16 %v411
        %v727 = vunpack.c.l.b16 %v412
        %v728 = vunpack.c.h.b16 %v412
        %v729 = vunpack.c.l.b16 %v413
        %v730 = vunpack.c.h.b16 %v413
        %v731 = vunpack.c.l.b16 %v414
        %v732 = vunpack.c.h.b16 %v414
        %v733 = vunpack.c.l.b16 %v415
        %v734 = vunpack.c.h.b16 %v415
        %v735 = vunpack.c.l.b16 %v416
        %v736 = vunpack.c.h.b16 %v416
        %v737 = vunpack.c.l.b16 %v417
        %v738 = vunpack.c.h.b16 %v417
        %v739 = vunpack.c.l.b16 %v418
        %v740 = vunpack.c.h.b16 %v418
        %v741 = vunpack.c.l.b16 %v419
        %v742 = vunpack.c.h.b16 %v419
        %v743 = vunpack.c.l.b16 %v420
        %v744 = vunpack.c.h.b16 %v420
        %v745 = vunpack.c.l.b16 %v421
        %v746 = vunpack.c.h.b16 %v421
        %v747 = vunpack.c.l.b16 %v422
        %v748 = vunpack.c.h.b16 %v422
        %v749 = vunpack.c.l.b16 %v423
        %v750 = vunpack.c.h.b16 %v423
        %v751 = vunpack.c.l.b16 %v424
        %v752 = vunpack.c.h.b16 %v424
        %v753 = vunpack.c.l.b16 %v425
        %v754 = vunpack.c.h.b16 %v425
        %v755 = vunpack.c.l.b16 %v426
        %v756 = vunpack.c.h.b16 %v426
        %v757 = vpack.c.b16 %v571, %v565
        %v758 = vpack.c.b16 %v572, %v566
        %v759 = vpack.c.b16 %v573, %v567
        %v760 = vpack.c.b16 %v574, %v568
        %v761 = vpack.c.b16 %v575, %v569
        %v762 = vpack.c.b16 %v576, %v570
        %v763 = vpack.c.b16 %v583, %v577
        %v764 = vpack.c.b16 %v584, %v578
        %v765 = vpack.c.b16 %v585, %v579
        %v766 = vpack.c.b16 %v586, %v580
        %v767 = vpack.c.b16 %v587, %v581
        %v768 = vpack.c.b16 %v588, %v582
        %v769 = vpack.c.b16 %v595, %v589
        %v770 = vpack.c.b16 %v596, %v590
        %v771 = vpack.c.b16 %v597, %v591
        %v772 = vpack.c.b16 %v598, %v592
        %v773 = vpack.c.b16 %v599, %v593
        %v774 = vpack.c.b16 %v600, %v594
        %v775 = vpack.c.b16 %v607, %v601
        %v776 = vpack.c.b16 %v608, %v602
        %v777 = vpack.c.b16 %v609, %v603
        %v778 = vpack.c.b16 %v610, %v604
        %v779 = vpack.c.b16 %v611, %v605
        %v780 = vpack.c.b16 %v612, %v606
        %v781 = vpack.c.b16 %v619, %v613
        %v782 = vpack.c.b16 %v620, %v614
        %v783 = vpack.c.b16 %v621, %v615
        %v784 = vpack.c.b16 %v622, %v616
        %v785 = vpack.c.b16 %v623, %v617
        %v786 = vpack.c.b16 %v624, %v618
        %v787 = vpack.c.b16 %v631, %v625
        %v788 = vpack.c.b16 %v632, %v626
        %v789 = vpack.c.b16 %v633, %v627
        %v790 = vpack.c.b16 %v634, %v628
        %v791 = vpack.c.b16 %v635, %v629
        %v792 = vpack.c.b16 %v636, %v630
        %v793 = vpack.c.b16 %v643, %v637
        %v794 = vpack.c.b16 %v644, %v638
        %v795 = vpack.c.b16 %v645, %v639
        %v796 = vpack.c.b16 %v646, %v640
        %v797 = vpack.c.b16 %v647, %v641
        %v798 = vpack.c.b16 %v648, %v642
        %v799 = vpack.c.b16 %v655, %v649
        %v800 = vpack.c.b16 %v656, %v650
        %v801 = vpack.c.b16 %v657, %v651
        %v802 = vpack.c.b16 %v658, %v652
        %v803 = vpack.c.b16 %v659, %v653
        %v804 = vpack.c.b16 %v660, %v654
        %v805 = vpack.c.b16 %v667, %v661
        %v806 = vpack.c.b16 %v668, %v662
        %v807 = vpack.c.b16 %v669, %v663
        %v808 = vpack.c.b16 %v670, %v664
        %v809 = vpack.c.b16 %v671, %v665
        %v810 = vpack.c.b16 %v672, %v666
        %v811 = vpack.c.b16 %v679, %v673
        %v812 = vpack.c.b16 %v680, %v674
        %v813 = vpack.c.b16 %v681, %v675
        %v814 = vpack.c.b16 %v682, %v676
        %v815 = vpack.c.b16 %v683, %v677
        %v816 = vpack.c.b16 %v684, %v678
        %v817 = vpack.c.b16 %v691, %v685
        %v818 = vpack.c.b16 %v692, %v686
        %v819 = vpack.c.b16 %v693, %v687
        %v820 = vpack.c.b16 %v694, %v688
        %v821 = vpack.c.b16 %v695, %v689
        %v822 = vpack.c.b16 %v696, %v690
        %v823 = vpack.c.b16 %v703, %v697
        %v824 = vpack.c.b16 %v704, %v698
        %v825 = vpack.c.b16 %v705, %v699
        %v826 = vpack.c.b16 %v706, %v700
        %v827 = vpack.c.b16 %v707, %v701
        %v828 = vpack.c.b16 %v708, %v702
        %v829 = vpack.c.b16 %v715, %v709
        %v830 = vpack.c.b16 %v716, %v710
        %v831 = vpack.c.b16 %v717, %v711
        %v832 = vpack.c.b16 %v718, %v712
        %v833 = vpack.c.b16 %v719, %v713
        %v834 = vpack.c.b16 %v720, %v714
        %v835 = vpack.c.b16 %v727, %v721
        %v836 = vpack.c.b16 %v728, %v722
        %v837 = vpack.c.b16 %v729, %v723
        %v838 = vpack.c.b16 %v730, %v724
        %v839 = vpack.c.b16 %v731, %v725
        %v840 = vpack.c.b16 %v732, %v726
        %v841 = vpack.c.b16 %v739, %v733
        %v842 = vpack.c.b16 %v740, %v734
        %v843 = vpack.c.b16 %v741, %v735
        %v844 = vpack.c.b16 %v742, %v736
        %v845 = vpack.c.b16 %v743, %v737
        %v846 = vpack.c.b16 %v744, %v738
        %v847 = vpack.c.b16 %v751, %v745
        %v848 = vpack.c.b16 %v752, %v746
        %v849 = vpack.c.b16 %v753, %v747
        %v850 = vpack.c.b16 %v754, %v748
        %v851 = vpack.c.b16 %v755, %v749
        %v852 = vpack.c.b16 %v756, %v750
        %949 = vmatprep.subr.bf16.mxu0 %v758
        %950 = vmatpush1.bf16.msra.mxu0 %v757
        %951 = vmatprep.subr.bf16.mxu0 %v764
        %952 = vmatpush1.bf16.msra.mxu0 %v763
        %953 = vmatprep.subr.bf16.mxu0 %v770
        %954 = vmatpush1.bf16.msra.mxu0 %v769
        %955 = vmatprep.subr.bf16.mxu0 %v776
        %956 = vmatpush1.bf16.msra.mxu0 %v775
        %957 = vmatprep.subr.bf16.mxu0 %v782
        %958 = vmatpush1.bf16.msra.mxu0 %v781
        %959 = vmatprep.subr.bf16.mxu0 %v788
        %960 = vmatpush1.bf16.msra.mxu0 %v787
        %961 = vmatprep.subr.bf16.mxu0 %v794
        %962 = vmatpush1.bf16.msra.mxu0 %v793
        %963 = vmatprep.subr.bf16.mxu0 %v800
        %964 = vmatpush1.bf16.msra.mxu0 %v799
        %965 = vmatprep.subr.bf16.mxu0 %v806
        %966 = vmatpush1.bf16.msra.mxu0 %v805
        %967 = vmatprep.subr.bf16.mxu0 %v812
        %968 = vmatpush1.bf16.msra.mxu0 %v811
        %969 = vmatprep.subr.bf16.mxu0 %v818
        %970 = vmatpush1.bf16.msra.mxu0 %v817
        %971 = vmatprep.subr.bf16.mxu0 %v824
        %972 = vmatpush1.bf16.msra.mxu0 %v823
        %973 = vmatprep.subr.bf16.mxu0 %v830
        %974 = vmatpush1.bf16.msra.mxu0 %v829
        %975 = vmatprep.subr.bf16.mxu0 %v836
        %976 = vmatpush1.bf16.msra.mxu0 %v835
        %977 = vmatprep.subr.bf16.mxu0 %v842
        %978 = vmatpush1.bf16.msra.mxu0 %v841
        %979 = vmatprep.subr.bf16.mxu0 %v848
        %980 = vmatpush1.bf16.msra.mxu0 %v847
        %981 = vmatprep.mubr.bf16.mxu0 %v466
        %982 = vmatmul.mubr.bf16.gmra.mrb[0].mxu0 %v465
        %v983 = vpop.f32.mrb[0].mxu0
        %v984 = vadd.f32 %v432, %v983
        %v985 = vpop.f32.mrb[0].mxu0
        %v986 = vadd.f32 %v436, %v985
        %v987 = vpop.f32.mrb[0].mxu0
        %v988 = vadd.f32 %v432, %v987
        %v989 = vpop.f32.mrb[0].mxu0
        %v990 = vadd.f32 %v436, %v989
        %991 = vdwg.mxu0
        %992 = vmatprep.subr.bf16.mxu0 %v760
        %993 = vmatpush1.bf16.msra.mxu0 %v759
        %994 = vmatprep.subr.bf16.mxu0 %v766
        %995 = vmatpush1.bf16.msra.mxu0 %v765
        %996 = vmatprep.subr.bf16.mxu0 %v772
        %997 = vmatpush1.bf16.msra.mxu0 %v771
        %998 = vmatprep.subr.bf16.mxu0 %v778
        %999 = vmatpush1.bf16.msra.mxu0 %v777
        %1000 = vmatprep.subr.bf16.mxu0 %v784
        %1001 = vmatpush1.bf16.msra.mxu0 %v783
        %1002 = vmatprep.subr.bf16.mxu0 %v790
        %1003 = vmatpush1.bf16.msra.mxu0 %v789
        %1004 = vmatprep.subr.bf16.mxu0 %v796
        %1005 = vmatpush1.bf16.msra.mxu0 %v795
        %1006 = vmatprep.subr.bf16.mxu0 %v802
        %1007 = vmatpush1.bf16.msra.mxu0 %v801
        %1008 = vmatprep.subr.bf16.mxu0 %v808
        %1009 = vmatpush1.bf16.msra.mxu0 %v807
        %1010 = vmatprep.subr.bf16.mxu0 %v814
        %1011 = vmatpush1.bf16.msra.mxu0 %v813
        %1012 = vmatprep.subr.bf16.mxu0 %v820
        %1013 = vmatpush1.bf16.msra.mxu0 %v819
        %1014 = vmatprep.subr.bf16.mxu0 %v826
        %1015 = vmatpush1.bf16.msra.mxu0 %v825
        %1016 = vmatprep.subr.bf16.mxu0 %v832
        %1017 = vmatpush1.bf16.msra.mxu0 %v831
        %1018 = vmatprep.subr.bf16.mxu0 %v838
        %1019 = vmatpush1.bf16.msra.mxu0 %v837
        %1020 = vmatprep.subr.bf16.mxu0 %v844
        %1021 = vmatpush1.bf16.msra.mxu0 %v843
        %1022 = vmatprep.subr.bf16.mxu0 %v850
        %1023 = vmatpush1.bf16.msra.mxu0 %v849
        %1024 = vmatprep.mubr.bf16.mxu0 %v466
        %1025 = vmatmul.mubr.bf16.gmra.mrb[0].mxu0 %v465
        %v1026 = vpop.f32.mrb[0].mxu0
        %v1027 = vadd.f32 %v440, %v1026
        %v1028 = vpop.f32.mrb[0].mxu0
        %v1029 = vadd.f32 %v444, %v1028
        %v1030 = vpop.f32.mrb[0].mxu0
        %v1031 = vadd.f32 %v440, %v1030
        %v1032 = vpop.f32.mrb[0].mxu0
        %v1033 = vadd.f32 %v444, %v1032
        %1034 = vdwg.mxu0
        %1035 = vmatprep.subr.bf16.mxu0 %v762
        %1036 = vmatpush1.bf16.msra.mxu0 %v761
        %1037 = vmatprep.subr.bf16.mxu0 %v768
        %1038 = vmatpush1.bf16.msra.mxu0 %v767
        %1039 = vmatprep.subr.bf16.mxu0 %v774
        %1040 = vmatpush1.bf16.msra.mxu0 %v773
        %1041 = vmatprep.subr.bf16.mxu0 %v780
        %1042 = vmatpush1.bf16.msra.mxu0 %v779
        %1043 = vmatprep.subr.bf16.mxu0 %v786
        %1044 = vmatpush1.bf16.msra.mxu0 %v785
        %1045 = vmatprep.subr.bf16.mxu0 %v792
        %1046 = vmatpush1.bf16.msra.mxu0 %v791
        %1047 = vmatprep.subr.bf16.mxu0 %v798
        %1048 = vmatpush1.bf16.msra.mxu0 %v797
        %1049 = vmatprep.subr.bf16.mxu0 %v804
        %1050 = vmatpush1.bf16.msra.mxu0 %v803
        %1051 = vmatprep.subr.bf16.mxu0 %v810
        %1052 = vmatpush1.bf16.msra.mxu0 %v809
        %1053 = vmatprep.subr.bf16.mxu0 %v816
        %1054 = vmatpush1.bf16.msra.mxu0 %v815
        %1055 = vmatprep.subr.bf16.mxu0 %v822
        %1056 = vmatpush1.bf16.msra.mxu0 %v821
        %1057 = vmatprep.subr.bf16.mxu0 %v828
        %1058 = vmatpush1.bf16.msra.mxu0 %v827
        %1059 = vmatprep.subr.bf16.mxu0 %v834
        %1060 = vmatpush1.bf16.msra.mxu0 %v833
        %1061 = vmatprep.subr.bf16.mxu0 %v840
        %1062 = vmatpush1.bf16.msra.mxu0 %v839
        %1063 = vmatprep.subr.bf16.mxu0 %v846
        %1064 = vmatpush1.bf16.msra.mxu0 %v845
        %1065 = vmatprep.subr.bf16.mxu0 %v852
        %1066 = vmatpush1.bf16.msra.mxu0 %v851
        %1067 = vmatprep.mubr.bf16.mxu0 %v466
        %1068 = vmatmul.mubr.bf16.gmra.mrb[0].mxu0 %v465
        %v1069 = vpop.f32.mrb[0].mxu0
        %v1070 = vadd.f32 %v448, %v1069
        %v1071 = vpop.f32.mrb[0].mxu0
        %v1072 = vadd.f32 %v452, %v1071
        %v1073 = vpop.f32.mrb[0].mxu0
        %v1074 = vadd.f32 %v448, %v1073
        %v1075 = vpop.f32.mrb[0].mxu0
        %v1076 = vadd.f32 %v452, %v1075
        %1077 = vdwg.mxu0
        %v1078 = vsel %vm327, 1, 0
        %v1079 = vsel %vm328, 1, 0
        %vm1080 = vcmp.eq.s32.totalorder %v1078, 1
        %vm1081 = vcmp.eq.s32.totalorder %v1079, 1
        %v1082 = vsel %vm1080, %v1070, 0.0
        %v1083 = vsel %vm1080, %v1072, 0.0
        %v1084 = vsel %vm1081, %v1074, 0.0
        %v1085 = vsel %vm1081, %v1076, 0.0
        %v1086 = vld [vmem:[#allocation12] sm:$0xff]
        %v1087 = vld [vmem:[#allocation12 + $0x8] sm:$0xff]
        %v1088 = vld [vmem:[#allocation12 + $0x10] sm:$0x7]
        %v1089 = vld [vmem:[#allocation12 + $0x18] sm:$0x7]
        %v1090 = vrot.slane %v1082, 3
        %v1091 = vrot.slane %v1083, 3
        %v1092 = vrot.slane %v1084, 3
        %v1093 = vrot.slane %v1085, 3
        %vm1094 = vcmp.lt.s32.totalorder %v322, 5
        %v1095 = vsel %vm1094, %v1090, %v1092
        %v1096 = vsel %vm1094, %v1091, %v1093
        %v1097 = vsel %vm1094, %v1092, %v1090
        %v1098 = vsel %vm1094, %v1093, %v1091
        %vm1099 = vcmp.ge.s32.totalorder %v322, 5
        %vm1100 = vcmp.ge.s32.totalorder %v323, 5
        %v1101 = vsel %vm1099, 1, 0
        %v1102 = vsel %vm1100, 1, 0
        %vm1103 = vcmp.eq.s32.totalorder %v1101, 1
        %vm1104 = vcmp.eq.s32.totalorder %v1102, 1
        %v1105 = vsel %vm1103, %v1097, 0.0
        %v1106 = vsel %vm1103, %v1098, 0.0
        %v1107 = vsel %vm1104, %v1095, 0.0
        %v1108 = vsel %vm1104, %v1096, 0.0
        %v1109 = vlaneseq
        %v1110 = vshrl.u32 %v1109, 7
        %v1111 = vsub.s32 0, %v1110
        %v1112 = vrot.slane %v1086, %v1111
        %v1113 = vlaneseq
        %v1114 = vshrl.u32 %v1113, 7
        %v1115 = vsub.s32 0, %v1114
        %v1116 = vrot.slane %v1087, %v1115
        %v1117 = vmul.f32 %v1105, %v1112
        %v1118 = vmul.f32 %v1106, %v1116
        %v1119 = vmul.f32 %v1107, %v1112
        %v1120 = vmul.f32 %v1108, %v1116
        %v1121 = vadd.f32 %v1082, %v1117
        %v1122 = vadd.f32 %v1083, %v1118
        %v1123 = vadd.f32 %v1084, %v1119
        %v1124 = vadd.f32 %v1085, %v1120
        %v1125 = vrot.slane %v1082, 4
        %v1126 = vrot.slane %v1083, 4
        %v1127 = vrot.slane %v1084, 4
        %v1128 = vrot.slane %v1085, 4
        %vm1129 = vcmp.lt.s32.totalorder %v322, 4
        %v1130 = vsel %vm1129, %v1125, %v1127
        %v1131 = vsel %vm1129, %v1126, %v1128
        %v1132 = vsel %vm1129, %v1127, %v1125
        %v1133 = vsel %vm1129, %v1128, %v1126
        %vm1134 = vcmp.ge.s32.totalorder %v322, 4
        %vm1135 = vcmp.ge.s32.totalorder %v323, 4
        %v1136 = vsel %vm1134, 1, 0
        %v1137 = vsel %vm1135, 1, 0
        %vm1138 = vcmp.eq.s32.totalorder %v1136, 1
        %vm1139 = vcmp.eq.s32.totalorder %v1137, 1
        %v1140 = vsel %vm1138, %v1132, 0.0
        %v1141 = vsel %vm1138, %v1133, 0.0
        %v1142 = vsel %vm1139, %v1130, 0.0
        %v1143 = vsel %vm1139, %v1131, 0.0
        %v1144 = vlaneseq
        %v1145 = vshrl.u32 %v1144, 7
        %v1146 = vsub.s32 1, %v1145
        %v1147 = vrot.slane %v1086, %v1146
        %v1148 = vlaneseq
        %v1149 = vshrl.u32 %v1148, 7
        %v1150 = vsub.s32 1, %v1149
        %v1151 = vrot.slane %v1087, %v1150
        %v1152 = vmul.f32 %v1140, %v1147
        %v1153 = vmul.f32 %v1141, %v1151
        %v1154 = vmul.f32 %v1142, %v1147
        %v1155 = vmul.f32 %v1143, %v1151
        %v1156 = vadd.f32 %v1121, %v1152
        %v1157 = vadd.f32 %v1122, %v1153
        %v1158 = vadd.f32 %v1123, %v1154
        %v1159 = vadd.f32 %v1124, %v1155
        %v1160 = vrot.slane %v1082, 5
        %v1161 = vrot.slane %v1083, 5
        %v1162 = vrot.slane %v1084, 5
        %v1163 = vrot.slane %v1085, 5
        %vm1164 = vcmp.lt.s32.totalorder %v322, 3
        %v1165 = vsel %vm1164, %v1160, %v1162
        %v1166 = vsel %vm1164, %v1161, %v1163
        %v1167 = vsel %vm1164, %v1162, %v1160
        %v1168 = vsel %vm1164, %v1163, %v1161
        %vm1169 = vcmp.ge.s32.totalorder %v322, 3
        %vm1170 = vcmp.ge.s32.totalorder %v323, 3
        %v1171 = vsel %vm1169, 1, 0
        %v1172 = vsel %vm1170, 1, 0
        %vm1173 = vcmp.eq.s32.totalorder %v1171, 1
        %vm1174 = vcmp.eq.s32.totalorder %v1172, 1
        %v1175 = vsel %vm1173, %v1167, 0.0
        %v1176 = vsel %vm1173, %v1168, 0.0
        %v1177 = vsel %vm1174, %v1165, 0.0
        %v1178 = vsel %vm1174, %v1166, 0.0
        %v1179 = vlaneseq
        %v1180 = vshrl.u32 %v1179, 7
        %v1181 = vsub.s32 2, %v1180
        %v1182 = vrot.slane %v1086, %v1181
        %v1183 = vlaneseq
        %v1184 = vshrl.u32 %v1183, 7
        %v1185 = vsub.s32 2, %v1184
        %v1186 = vrot.slane %v1087, %v1185
        %v1187 = vmul.f32 %v1175, %v1182
        %v1188 = vmul.f32 %v1176, %v1186
        %v1189 = vmul.f32 %v1177, %v1182
        %v1190 = vmul.f32 %v1178, %v1186
        %v1191 = vadd.f32 %v1156, %v1187
        %v1192 = vadd.f32 %v1157, %v1188
        %v1193 = vadd.f32 %v1158, %v1189
        %v1194 = vadd.f32 %v1159, %v1190
        %v1195 = vrot.slane %v1082, 6
        %v1196 = vrot.slane %v1083, 6
        %v1197 = vrot.slane %v1084, 6
        %v1198 = vrot.slane %v1085, 6
        %vm1199 = vcmp.lt.s32.totalorder %v322, 2
        %v1200 = vsel %vm1199, %v1195, %v1197
        %v1201 = vsel %vm1199, %v1196, %v1198
        %v1202 = vsel %vm1199, %v1197, %v1195
        %v1203 = vsel %vm1199, %v1198, %v1196
        %vm1204 = vcmp.ge.s32.totalorder %v322, 2
        %vm1205 = vcmp.ge.s32.totalorder %v323, 2
        %v1206 = vsel %vm1204, 1, 0
        %v1207 = vsel %vm1205, 1, 0
        %vm1208 = vcmp.eq.s32.totalorder %v1206, 1
        %vm1209 = vcmp.eq.s32.totalorder %v1207, 1
        %v1210 = vsel %vm1208, %v1202, 0.0
        %v1211 = vsel %vm1208, %v1203, 0.0
        %v1212 = vsel %vm1209, %v1200, 0.0
        %v1213 = vsel %vm1209, %v1201, 0.0
        %v1214 = vlaneseq
        %v1215 = vshrl.u32 %v1214, 7
        %v1216 = vsub.s32 3, %v1215
        %v1217 = vrot.slane %v1086, %v1216
        %v1218 = vlaneseq
        %v1219 = vshrl.u32 %v1218, 7
        %v1220 = vsub.s32 3, %v1219
        %v1221 = vrot.slane %v1087, %v1220
        %v1222 = vmul.f32 %v1210, %v1217
        %v1223 = vmul.f32 %v1211, %v1221
        %v1224 = vmul.f32 %v1212, %v1217
        %v1225 = vmul.f32 %v1213, %v1221
        %v1226 = vadd.f32 %v1191, %v1222
        %v1227 = vadd.f32 %v1192, %v1223
        %v1228 = vadd.f32 %v1193, %v1224
        %v1229 = vadd.f32 %v1194, %v1225
        %v1230 = vrot.slane %v1082, 7
        %v1231 = vrot.slane %v1083, 7
        %v1232 = vrot.slane %v1084, 7
        %v1233 = vrot.slane %v1085, 7
        %vm1234 = vcmp.lt.s32.totalorder %v322, 1
        %v1235 = vsel %vm1234, %v1230, %v1232
        %v1236 = vsel %vm1234, %v1231, %v1233
        %v1237 = vsel %vm1234, %v1232, %v1230
        %v1238 = vsel %vm1234, %v1233, %v1231
        %vm1239 = vcmp.ge.s32.totalorder %v322, 1
        %vm1240 = vcmp.ge.s32.totalorder %v323, 1
        %v1241 = vsel %vm1239, 1, 0
        %v1242 = vsel %vm1240, 1, 0
        %vm1243 = vcmp.eq.s32.totalorder %v1241, 1
        %vm1244 = vcmp.eq.s32.totalorder %v1242, 1
        %v1245 = vsel %vm1243, %v1237, 0.0
        %v1246 = vsel %vm1243, %v1238, 0.0
        %v1247 = vsel %vm1244, %v1235, 0.0
        %v1248 = vsel %vm1244, %v1236, 0.0
        %v1249 = vlaneseq
        %v1250 = vshrl.u32 %v1249, 7
        %v1251 = vsub.s32 4, %v1250
        %v1252 = vrot.slane %v1086, %v1251
        %v1253 = vlaneseq
        %v1254 = vshrl.u32 %v1253, 7
        %v1255 = vsub.s32 4, %v1254
        %v1256 = vrot.slane %v1087, %v1255
        %v1257 = vmul.f32 %v1245, %v1252
        %v1258 = vmul.f32 %v1246, %v1256
        %v1259 = vmul.f32 %v1247, %v1252
        %v1260 = vmul.f32 %v1248, %v1256
        %v1261 = vadd.f32 %v1226, %v1257
        %v1262 = vadd.f32 %v1227, %v1258
        %v1263 = vadd.f32 %v1228, %v1259
        %v1264 = vadd.f32 %v1229, %v1260
        %v1265 = vlaneseq
        %v1266 = vshrl.u32 %v1265, 7
        %v1267 = vsub.s32 5, %v1266
        %v1268 = vrot.slane %v1086, %v1267
        %v1269 = vlaneseq
        %v1270 = vshrl.u32 %v1269, 7
        %v1271 = vsub.s32 5, %v1270
        %v1272 = vrot.slane %v1087, %v1271
        %v1273 = vmul.f32 %v1082, %v1268
        %v1274 = vmul.f32 %v1083, %v1272
        %v1275 = vmul.f32 %v1084, %v1268
        %v1276 = vmul.f32 %v1085, %v1272
        %v1277 = vadd.f32 %v1261, %v1273
        %v1278 = vadd.f32 %v1262, %v1274
        %v1279 = vadd.f32 %v1263, %v1275
        %v1280 = vadd.f32 %v1264, %v1276
        %v1281 = vrot.slane %v1082, 1
        %v1282 = vrot.slane %v1083, 1
        %v1283 = vrot.slane %v1084, 1
        %v1284 = vrot.slane %v1085, 1
        %vm1285 = vcmp.lt.s32.totalorder %v322, 7
        %v1286 = vsel %vm1285, %v1281, %v1283
        %v1287 = vsel %vm1285, %v1282, %v1284
        %v1288 = vsel %vm1285, %v1283, %v1281
        %v1289 = vsel %vm1285, %v1284, %v1282
        %vm1290 = vcmp.lt.s32.totalorder %v322, 15
        %vm1291 = vcmp.lt.s32.totalorder %v323, 15
        %v1292 = vsel %vm1290, 1, 0
        %v1293 = vsel %vm1291, 1, 0
        %vm1294 = vcmp.eq.s32.totalorder %v1292, 1
        %vm1295 = vcmp.eq.s32.totalorder %v1293, 1
        %v1296 = vsel %vm1294, %v1286, 0.0
        %v1297 = vsel %vm1294, %v1287, 0.0
        %v1298 = vsel %vm1295, %v1288, 0.0
        %v1299 = vsel %vm1295, %v1289, 0.0
        %v1300 = vlaneseq
        %v1301 = vshrl.u32 %v1300, 7
        %v1302 = vsub.s32 6, %v1301
        %v1303 = vrot.slane %v1086, %v1302
        %v1304 = vlaneseq
        %v1305 = vshrl.u32 %v1304, 7
        %v1306 = vsub.s32 6, %v1305
        %v1307 = vrot.slane %v1087, %v1306
        %v1308 = vmul.f32 %v1296, %v1303
        %v1309 = vmul.f32 %v1297, %v1307
        %v1310 = vmul.f32 %v1298, %v1303
        %v1311 = vmul.f32 %v1299, %v1307
        %v1312 = vadd.f32 %v1277, %v1308
        %v1313 = vadd.f32 %v1278, %v1309
        %v1314 = vadd.f32 %v1279, %v1310
        %v1315 = vadd.f32 %v1280, %v1311
        %v1316 = vrot.slane %v1082, 2
        %v1317 = vrot.slane %v1083, 2
        %v1318 = vrot.slane %v1084, 2
        %v1319 = vrot.slane %v1085, 2
        %vm1320 = vcmp.lt.s32.totalorder %v322, 6
        %v1321 = vsel %vm1320, %v1316, %v1318
        %v1322 = vsel %vm1320, %v1317, %v1319
        %v1323 = vsel %vm1320, %v1318, %v1316
        %v1324 = vsel %vm1320, %v1319, %v1317
        %vm1325 = vcmp.lt.s32.totalorder %v322, 14
        %vm1326 = vcmp.lt.s32.totalorder %v323, 14
        %v1327 = vsel %vm1325, 1, 0
        %v1328 = vsel %vm1326, 1, 0
        %vm1329 = vcmp.eq.s32.totalorder %v1327, 1
        %vm1330 = vcmp.eq.s32.totalorder %v1328, 1
        %v1331 = vsel %vm1329, %v1321, 0.0
        %v1332 = vsel %vm1329, %v1322, 0.0
        %v1333 = vsel %vm1330, %v1323, 0.0
        %v1334 = vsel %vm1330, %v1324, 0.0
        %v1335 = vlaneseq
        %v1336 = vshrl.u32 %v1335, 7
        %v1337 = vsub.s32 7, %v1336
        %v1338 = vrot.slane %v1086, %v1337
        %v1339 = vlaneseq
        %v1340 = vshrl.u32 %v1339, 7
        %v1341 = vsub.s32 7, %v1340
        %v1342 = vrot.slane %v1087, %v1341
        %v1343 = vmul.f32 %v1331, %v1338
        %v1344 = vmul.f32 %v1332, %v1342
        %v1345 = vmul.f32 %v1333, %v1338
        %v1346 = vmul.f32 %v1334, %v1342
        %v1347 = vadd.f32 %v1312, %v1343
        %v1348 = vadd.f32 %v1313, %v1344
        %v1349 = vadd.f32 %v1314, %v1345
        %v1350 = vadd.f32 %v1315, %v1346
        %vm1351 = vcmp.lt.s32.totalorder %v322, 13
        %vm1352 = vcmp.lt.s32.totalorder %v323, 13
        %v1353 = vsel %vm1351, 1, 0
        %v1354 = vsel %vm1352, 1, 0
        %vm1355 = vcmp.eq.s32.totalorder %v1353, 1
        %vm1356 = vcmp.eq.s32.totalorder %v1354, 1
        %v1357 = vsel %vm1355, %v1095, 0.0
        %v1358 = vsel %vm1355, %v1096, 0.0
        %v1359 = vsel %vm1356, %v1097, 0.0
        %v1360 = vsel %vm1356, %v1098, 0.0
        %v1361 = vlaneseq
        %v1362 = vshrl.u32 %v1361, 7
        %v1363 = vsub.s32 0, %v1362
        %v1364 = vrot.slane %v1088, %v1363
        %v1365 = vlaneseq
        %v1366 = vshrl.u32 %v1365, 7
        %v1367 = vsub.s32 0, %v1366
        %v1368 = vrot.slane %v1089, %v1367
        %v1369 = vmul.f32 %v1357, %v1364
        %v1370 = vmul.f32 %v1358, %v1368
        %v1371 = vmul.f32 %v1359, %v1364
        %v1372 = vmul.f32 %v1360, %v1368
        %v1373 = vadd.f32 %v1347, %v1369
        %v1374 = vadd.f32 %v1348, %v1370
        %v1375 = vadd.f32 %v1349, %v1371
        %v1376 = vadd.f32 %v1350, %v1372
        %vm1377 = vcmp.lt.s32.totalorder %v322, 12
        %vm1378 = vcmp.lt.s32.totalorder %v323, 12
        %v1379 = vsel %vm1377, 1, 0
        %v1380 = vsel %vm1378, 1, 0
        %vm1381 = vcmp.eq.s32.totalorder %v1379, 1
        %vm1382 = vcmp.eq.s32.totalorder %v1380, 1
        %v1383 = vsel %vm1381, %v1130, 0.0
        %v1384 = vsel %vm1381, %v1131, 0.0
        %v1385 = vsel %vm1382, %v1132, 0.0
        %v1386 = vsel %vm1382, %v1133, 0.0
        %v1387 = vlaneseq
        %v1388 = vshrl.u32 %v1387, 7
        %v1389 = vsub.s32 1, %v1388
        %v1390 = vrot.slane %v1088, %v1389
        %v1391 = vlaneseq
        %v1392 = vshrl.u32 %v1391, 7
        %v1393 = vsub.s32 1, %v1392
        %v1394 = vrot.slane %v1089, %v1393
        %v1395 = vmul.f32 %v1383, %v1390
        %v1396 = vmul.f32 %v1384, %v1394
        %v1397 = vmul.f32 %v1385, %v1390
        %v1398 = vmul.f32 %v1386, %v1394
        %v1399 = vadd.f32 %v1373, %v1395
        %v1400 = vadd.f32 %v1374, %v1396
        %v1401 = vadd.f32 %v1375, %v1397
        %v1402 = vadd.f32 %v1376, %v1398
        %vm1403 = vcmp.lt.s32.totalorder %v322, 11
        %vm1404 = vcmp.lt.s32.totalorder %v323, 11
        %v1405 = vsel %vm1403, 1, 0
        %v1406 = vsel %vm1404, 1, 0
        %vm1407 = vcmp.eq.s32.totalorder %v1405, 1
        %vm1408 = vcmp.eq.s32.totalorder %v1406, 1
        %v1409 = vsel %vm1407, %v1165, 0.0
        %v1410 = vsel %vm1407, %v1166, 0.0
        %v1411 = vsel %vm1408, %v1167, 0.0
        %v1412 = vsel %vm1408, %v1168, 0.0
        %v1413 = vlaneseq
        %v1414 = vshrl.u32 %v1413, 7
        %v1415 = vsub.s32 2, %v1414
        %v1416 = vrot.slane %v1088, %v1415
        %v1417 = vlaneseq
        %v1418 = vshrl.u32 %v1417, 7
        %v1419 = vsub.s32 2, %v1418
        %v1420 = vrot.slane %v1089, %v1419
        %v1421 = vmul.f32 %v1409, %v1416
        %v1422 = vmul.f32 %v1410, %v1420
        %v1423 = vmul.f32 %v1411, %v1416
        %v1424 = vmul.f32 %v1412, %v1420
        %v1425 = vadd.f32 %v1399, %v1421
        %v1426 = vadd.f32 %v1400, %v1422
        %v1427 = vadd.f32 %v1401, %v1423
        %v1428 = vadd.f32 %v1402, %v1424
        %v1429 = vsel %vm1080, %v1425, 0.0
        %v1430 = vsel %vm1080, %v1426, 0.0
        %v1431 = vsel %vm1081, %v1427, 0.0
        %v1432 = vsel %vm1081, %v1428, 0.0
        %1433 = vst [vmem:[%s318] sm:$0xff] %v1429
        %1434 = vst [vmem:[%s318 + $0x8] sm:$0xff] %v1430
        %1435 = vst [vmem:[%s318 + $0x10] sm:$0xff] %v1431
        %1436 = vst [vmem:[%s318 + $0x18] sm:$0xff] %v1432
        %v1437 = vmul.f32 %v984, 0.088388346
        %v1438 = vmul.f32 %v986, 0.088388346
        %v1439 = vmul.f32 %v988, 0.088388346
        %v1440 = vmul.f32 %v990, 0.088388346
        %v1441 = vpack.c.bf16 %v1439, %v1437
        %v1442 = vpack.c.bf16 %v1440, %v1438
        %1443 = vst [vmem:[#allocation2] sm:$0xff] %v1441
        %1444 = vst [vmem:[#allocation2 + $0x8] sm:$0xff] %v1442
        %v1445 = vpack.c.bf16 %v1031, %v1027
        %v1446 = vpack.c.bf16 %v1033, %v1029
        %1447 = vst [vmem:[#allocation3] sm:$0xff] %v1445
        %1448 = vst [vmem:[#allocation3 + $0x8] sm:$0xff] %v1446
        %v1449 = vpack.c.bf16 %v1074, %v1070
        %v1450 = vpack.c.bf16 %v1076, %v1072
        %1451 = vst [vmem:[#allocation4] sm:$0xff] %v1449
        %1452 = vst [vmem:[#allocation4 + $0x8] sm:$0xff] %v1450
        %vm1453 = vcmp.lt.s32.totalorder %v325, %v326
        %v1454 = vsel %vm1453, 0.0, -1e+30
        %s1455 = smul.u32 0, 2
        %s1456 = smul.addr %s1455, 8
        %s1457 = scalar_lea.vmem [#allocation2], %s1456
        %v1458 = vld [vmem:[%s1457] sm:$0xff]
        %v1459 = vld [vmem:[#allocation3] sm:$0xff]
        %1460 = vmatprep.subr.bf16.mxu0 0
        %1461 = vmatpush1.bf16.xpose.msra.mxu0 %v1459
        %1462 = vmatprep.subr.bf16.mxu0 0
        %1463 = vmatpush1.bf16.xpose.msra.mxu0 0
        %1464 = vmatprep.subr.bf16.mxu0 0
        %1465 = vmatpush1.bf16.xpose.msra.mxu0 0
        %1466 = vmatprep.subr.bf16.mxu0 0
        %1467 = vmatpush1.bf16.xpose.msra.mxu0 0
        %1468 = vmatprep.subr.bf16.mxu0 0
        %1469 = vmatpush1.bf16.xpose.msra.mxu0 0
        %1470 = vmatprep.subr.bf16.mxu0 0
        %1471 = vmatpush1.bf16.xpose.msra.mxu0 0
        %1472 = vmatprep.subr.bf16.mxu0 0
        %1473 = vmatpush1.bf16.xpose.msra.mxu0 0
        %1474 = vmatprep.subr.bf16.mxu0 0
        %1475 = vmatpush1.bf16.xpose.msra.mxu0 0
        %1476 = vmatprep.subr.bf16.mxu0 0
        %1477 = vmatpush1.bf16.xpose.msra.mxu0 0
        %1478 = vmatprep.subr.bf16.mxu0 0
        %1479 = vmatpush1.bf16.xpose.msra.mxu0 0
        %1480 = vmatprep.subr.bf16.mxu0 0
        %1481 = vmatpush1.bf16.xpose.msra.mxu0 0
        %1482 = vmatprep.subr.bf16.mxu0 0
        %1483 = vmatpush1.bf16.xpose.msra.mxu0 0
        %1484 = vmatprep.subr.bf16.mxu0 0
        %1485 = vmatpush1.bf16.xpose.msra.mxu0 0
        %1486 = vmatprep.subr.bf16.mxu0 0
        %1487 = vmatpush1.bf16.xpose.msra.mxu0 0
        %1488 = vmatprep.subr.bf16.mxu0 0
        %1489 = vmatpush1.bf16.xpose.msra.mxu0 0
        %1490 = vmatprep.subr.bf16.mxu0 0
        %1491 = vmatpush1.bf16.xpose.msra.mxu0 0
        %1492 = vmatprep.mubr.bf16.mxu0 0
        %1493 = vmatmul.mubr.bf16.gmra.mrb[0].mxu0 %v1458
        %v1494 = vpop.f32.mrb[0].mxu0
        %v1495 = vadd.f32 %v1454, %v1494
        %v1496 = vpop.f32.mrb[0].mxu0
        %v1497 = vpop.f32.mrb[0].mxu0
        %v1498 = vadd.f32 %v1454, %v1497
        %v1499 = vpop.f32.mrb[0].mxu0
        %1500 = vdwg.mxu0
        %vm1501 = vcmask 130048
        %v1502 = vsel %vm1501, %v1495, -inf
        %1503 = vmax.xlane.f32.xlu0 %v1502
        %v1504 = vpop.xlane.xlu0 %1503
        %v1505 = vsel %vm1501, %v1498, -inf
        %1506 = vmax.xlane.f32.xlu0 %v1505
        %v1507 = vpop.xlane.xlu0 %1506
        %v1508 = vsub.f32 %v1495, %v1504
        %v1509 = vsub.f32 %v1498, %v1507
        %v1510 = vmul.f32 %v1508, 1.442695
        %v1511 = vpow.pop %v1510
        %v1512 = vmul.f32 %v1509, 1.442695
        %v1513 = vpow.pop %v1512
        %v1514 = vsel %vm1501, %v1511, 0.0
        %1515 = vadd.xlane.f32.xlu0 %v1514
        %v1516 = vpop.xlane.xlu0 %1515
        %v1517 = vsel %vm1501, %v1513, 0.0
        %1518 = vadd.xlane.f32.xlu0 %v1517
        %v1519 = vpop.xlane.xlu0 %1518
        %v1520 = vmax.f32 %v1516, 1e-30
        %v1521 = vmax.f32 %v1519, 1e-30
        %v1522 = vrcp.pop %v1520
        %v1523 = vrcp.pop %v1521
        %v1524 = vmul.f32 %v1511, %v1522
        %v1525 = vmul.f32 %v1513, %v1523
        %v1526 = vpack.c.bf16 %v1525, %v1524
        %v1527 = vld [vmem:[#allocation4] sm:$0xff]
        %v1529 = vsel %vm1501, %v1526, 0
        %1531 = vmatprep.subr.bf16.mxu0 0
        %1532 = vmatpush1.bf16.msra.mxu0 %v1527
        %1533 = vmatprep.subr.bf16.mxu0 0
        %1534 = vmatpush1.bf16.msra.mxu0 0
        %1535 = vmatprep.subr.bf16.mxu0 0
        %1536 = vmatpush1.bf16.msra.mxu0 0
        %1537 = vmatprep.subr.bf16.mxu0 0
        %1538 = vmatpush1.bf16.msra.mxu0 0
        %1539 = vmatprep.subr.bf16.mxu0 0
        %1540 = vmatpush1.bf16.msra.mxu0 0
        %1541 = vmatprep.subr.bf16.mxu0 0
        %1542 = vmatpush1.bf16.msra.mxu0 0
        %1543 = vmatprep.subr.bf16.mxu0 0
        %1544 = vmatpush1.bf16.msra.mxu0 0
        %1545 = vmatprep.subr.bf16.mxu0 0
        %1546 = vmatpush1.bf16.msra.mxu0 0
        %1547 = vmatprep.subr.bf16.mxu0 0
        %1548 = vmatpush1.bf16.msra.mxu0 0
        %1549 = vmatprep.subr.bf16.mxu0 0
        %1550 = vmatpush1.bf16.msra.mxu0 0
        %1551 = vmatprep.subr.bf16.mxu0 0
        %1552 = vmatpush1.bf16.msra.mxu0 0
        %1553 = vmatprep.subr.bf16.mxu0 0
        %1554 = vmatpush1.bf16.msra.mxu0 0
        %1555 = vmatprep.subr.bf16.mxu0 0
        %1556 = vmatpush1.bf16.msra.mxu0 0
        %1557 = vmatprep.subr.bf16.mxu0 0
        %1558 = vmatpush1.bf16.msra.mxu0 0
        %1559 = vmatprep.subr.bf16.mxu0 0
        %1560 = vmatpush1.bf16.msra.mxu0 0
        %1561 = vmatprep.subr.bf16.mxu0 0
        %1562 = vmatpush1.bf16.msra.mxu0 0
        %1563 = vmatprep.mubr.bf16.mxu0 0
        %1564 = vmatmul.mubr.bf16.gmra.mrb[0].mxu0 %v1529
        %v1565 = vpop.f32.mrb[0].mxu0
        %v1566 = vadd.f32 0.0, %v1565
        %v1567 = vpop.f32.mrb[0].mxu0
        %v1568 = vpop.f32.mrb[0].mxu0
        %v1569 = vadd.f32 0.0, %v1568
        %v1570 = vpop.f32.mrb[0].mxu0
        %1571 = vdwg.mxu0
        %v1572 = vpack.c.bf16 %v1569, %v1566
        %v1573 = vld [vmem:[#allocation13] sm:$0xff]
        %v1574 = vld [vmem:[#allocation13 + $0x8] sm:$0xff]
        %v1575 = vld [vmem:[#allocation13 + $0x10] sm:$0xff]
        %v1576 = vld [vmem:[#allocation13 + $0x18] sm:$0xff]
        %v1577 = vld [vmem:[#allocation13 + $0x20] sm:$0xff]
        %v1578 = vld [vmem:[#allocation13 + $0x28] sm:$0xff]
        %v1579 = vld [vmem:[#allocation13 + $0x30] sm:$0xff]
        %v1580 = vld [vmem:[#allocation13 + $0x38] sm:$0xff]
        %v1581 = vld [vmem:[#allocation13 + $0x40] sm:$0xff]
        %v1582 = vld [vmem:[#allocation13 + $0x48] sm:$0xff]
        %v1583 = vld [vmem:[#allocation13 + $0x50] sm:$0xff]
        %v1584 = vld [vmem:[#allocation13 + $0x58] sm:$0xff]
        %v1585 = vld [vmem:[#allocation13 + $0x60] sm:$0xff]
        %v1586 = vld [vmem:[#allocation13 + $0x68] sm:$0xff]
        %v1587 = vld [vmem:[#allocation13 + $0x70] sm:$0xff]
        %v1588 = vld [vmem:[#allocation13 + $0x78] sm:$0xff]
        %v1589 = vld [vmem:[%s1457 + $0x8] sm:$0xff]
        %v1590 = vld [vmem:[#allocation3 + $0x8] sm:$0xff]
        %1591 = vmatprep.subr.bf16.mxu0 0
        %1592 = vmatpush1.bf16.xpose.msra.mxu0 %v1590
        %1593 = vmatprep.subr.bf16.mxu0 0
        %1594 = vmatpush1.bf16.xpose.msra.mxu0 0
        %1595 = vmatprep.subr.bf16.mxu0 0
        %1596 = vmatpush1.bf16.xpose.msra.mxu0 0
        %1597 = vmatprep.subr.bf16.mxu0 0
        %1598 = vmatpush1.bf16.xpose.msra.mxu0 0
        %1599 = vmatprep.subr.bf16.mxu0 0
        %1600 = vmatpush1.bf16.xpose.msra.mxu0 0
        %1601 = vmatprep.subr.bf16.mxu0 0
        %1602 = vmatpush1.bf16.xpose.msra.mxu0 0
        %1603 = vmatprep.subr.bf16.mxu0 0
        %1604 = vmatpush1.bf16.xpose.msra.mxu0 0
        %1605 = vmatprep.subr.bf16.mxu0 0
        %1606 = vmatpush1.bf16.xpose.msra.mxu0 0
        %1607 = vmatprep.subr.bf16.mxu0 0
        %1608 = vmatpush1.bf16.xpose.msra.mxu0 0
        %1609 = vmatprep.subr.bf16.mxu0 0
        %1610 = vmatpush1.bf16.xpose.msra.mxu0 0
        %1611 = vmatprep.subr.bf16.mxu0 0
        %1612 = vmatpush1.bf16.xpose.msra.mxu0 0
        %1613 = vmatprep.subr.bf16.mxu0 0
        %1614 = vmatpush1.bf16.xpose.msra.mxu0 0
        %1615 = vmatprep.subr.bf16.mxu0 0
        %1616 = vmatpush1.bf16.xpose.msra.mxu0 0
        %1617 = vmatprep.subr.bf16.mxu0 0
        %1618 = vmatpush1.bf16.xpose.msra.mxu0 0
        %1619 = vmatprep.subr.bf16.mxu0 0
        %1620 = vmatpush1.bf16.xpose.msra.mxu0 0
        %1621 = vmatprep.subr.bf16.mxu0 0
        %1622 = vmatpush1.bf16.xpose.msra.mxu0 0
        %1623 = vmatprep.mubr.bf16.mxu0 0
        %1624 = vmatmul.mubr.bf16.gmra.mrb[0].mxu0 %v1589
        %v1625 = vpop.f32.mrb[0].mxu0
        %v1626 = vadd.f32 %v1454, %v1625
        %v1627 = vpop.f32.mrb[0].mxu0
        %v1628 = vpop.f32.mrb[0].mxu0
        %v1629 = vadd.f32 %v1454, %v1628
        %v1630 = vpop.f32.mrb[0].mxu0
        %1631 = vdwg.mxu0
        %v1632 = vsel %vm1501, %v1626, -inf
        %1633 = vmax.xlane.f32.xlu0 %v1632
        %v1634 = vpop.xlane.xlu0 %1633
        %v1635 = vsel %vm1501, %v1629, -inf
        %1636 = vmax.xlane.f32.xlu0 %v1635
        %v1637 = vpop.xlane.xlu0 %1636
        %v1638 = vsub.f32 %v1626, %v1634
        %v1639 = vsub.f32 %v1629, %v1637
        %v1640 = vmul.f32 %v1638, 1.442695
        %v1641 = vpow.pop %v1640
        %v1642 = vmul.f32 %v1639, 1.442695
        %v1643 = vpow.pop %v1642
        %v1644 = vsel %vm1501, %v1641, 0.0
        %1645 = vadd.xlane.f32.xlu0 %v1644
        %v1646 = vpop.xlane.xlu0 %1645
        %v1647 = vsel %vm1501, %v1643, 0.0
        %1648 = vadd.xlane.f32.xlu0 %v1647
        %v1649 = vpop.xlane.xlu0 %1648
        %v1650 = vmax.f32 %v1646, 1e-30
        %v1651 = vmax.f32 %v1649, 1e-30
        %v1652 = vrcp.pop %v1650
        %v1653 = vrcp.pop %v1651
        %v1654 = vmul.f32 %v1641, %v1652
        %v1655 = vmul.f32 %v1643, %v1653
        %v1656 = vpack.c.bf16 %v1655, %v1654
        %v1657 = vld [vmem:[#allocation4 + $0x8] sm:$0xff]
        %v1659 = vsel %vm1501, %v1656, 0
        %1661 = vmatprep.subr.bf16.mxu0 0
        %1662 = vmatpush1.bf16.msra.mxu0 %v1657
        %1663 = vmatprep.subr.bf16.mxu0 0
        %1664 = vmatpush1.bf16.msra.mxu0 0
        %1665 = vmatprep.subr.bf16.mxu0 0
        %1666 = vmatpush1.bf16.msra.mxu0 0
        %1667 = vmatprep.subr.bf16.mxu0 0
        %1668 = vmatpush1.bf16.msra.mxu0 0
        %1669 = vmatprep.subr.bf16.mxu0 0
        %1670 = vmatpush1.bf16.msra.mxu0 0
        %1671 = vmatprep.subr.bf16.mxu0 0
        %1672 = vmatpush1.bf16.msra.mxu0 0
        %1673 = vmatprep.subr.bf16.mxu0 0
        %1674 = vmatpush1.bf16.msra.mxu0 0
        %1675 = vmatprep.subr.bf16.mxu0 0
        %1676 = vmatpush1.bf16.msra.mxu0 0
        %1677 = vmatprep.subr.bf16.mxu0 0
        %1678 = vmatpush1.bf16.msra.mxu0 0
        %1679 = vmatprep.subr.bf16.mxu0 0
        %1680 = vmatpush1.bf16.msra.mxu0 0
        %1681 = vmatprep.subr.bf16.mxu0 0
        %1682 = vmatpush1.bf16.msra.mxu0 0
        %1683 = vmatprep.subr.bf16.mxu0 0
        %1684 = vmatpush1.bf16.msra.mxu0 0
        %1685 = vmatprep.subr.bf16.mxu0 0
        %1686 = vmatpush1.bf16.msra.mxu0 0
        %1687 = vmatprep.subr.bf16.mxu0 0
        %1688 = vmatpush1.bf16.msra.mxu0 0
        %1689 = vmatprep.subr.bf16.mxu0 0
        %1690 = vmatpush1.bf16.msra.mxu0 0
        %1691 = vmatprep.subr.bf16.mxu0 0
        %1692 = vmatpush1.bf16.msra.mxu0 0
        %1693 = vmatprep.mubr.bf16.mxu0 0
        %1694 = vmatmul.mubr.bf16.gmra.mrb[0].mxu0 %v1659
        %v1695 = vpop.f32.mrb[0].mxu0
        %v1696 = vadd.f32 0.0, %v1695
        %v1697 = vpop.f32.mrb[0].mxu0
        %v1698 = vpop.f32.mrb[0].mxu0
        %v1699 = vadd.f32 0.0, %v1698
        %v1700 = vpop.f32.mrb[0].mxu0
        %1701 = vdwg.mxu0
        %v1702 = vpack.c.bf16 %v1699, %v1696
        %v1703 = vld [vmem:[#allocation13 + $0x80] sm:$0xff]
        %v1704 = vld [vmem:[#allocation13 + $0x88] sm:$0xff]
        %v1705 = vld [vmem:[#allocation13 + $0x90] sm:$0xff]
        %v1706 = vld [vmem:[#allocation13 + $0x98] sm:$0xff]
        %v1707 = vld [vmem:[#allocation13 + $0xa0] sm:$0xff]
        %v1708 = vld [vmem:[#allocation13 + $0xa8] sm:$0xff]
        %v1709 = vld [vmem:[#allocation13 + $0xb0] sm:$0xff]
        %v1710 = vld [vmem:[#allocation13 + $0xb8] sm:$0xff]
        %v1711 = vld [vmem:[#allocation13 + $0xc0] sm:$0xff]
        %v1712 = vld [vmem:[#allocation13 + $0xc8] sm:$0xff]
        %v1713 = vld [vmem:[#allocation13 + $0xd0] sm:$0xff]
        %v1714 = vld [vmem:[#allocation13 + $0xd8] sm:$0xff]
        %v1715 = vld [vmem:[#allocation13 + $0xe0] sm:$0xff]
        %v1716 = vld [vmem:[#allocation13 + $0xe8] sm:$0xff]
        %v1717 = vld [vmem:[#allocation13 + $0xf0] sm:$0xff]
        %v1718 = vld [vmem:[#allocation13 + $0xf8] sm:$0xff]
        %v1735 = vunpack.c.l.b16 %v1703
        %v1736 = vunpack.c.h.b16 %v1703
        %v1737 = vunpack.c.l.b16 %v1704
        %v1738 = vunpack.c.h.b16 %v1704
        %v1739 = vunpack.c.l.b16 %v1705
        %v1740 = vunpack.c.h.b16 %v1705
        %v1741 = vunpack.c.l.b16 %v1706
        %v1742 = vunpack.c.h.b16 %v1706
        %v1743 = vunpack.c.l.b16 %v1707
        %v1744 = vunpack.c.h.b16 %v1707
        %v1745 = vunpack.c.l.b16 %v1708
        %v1746 = vunpack.c.h.b16 %v1708
        %v1747 = vunpack.c.l.b16 %v1709
        %v1748 = vunpack.c.h.b16 %v1709
        %v1749 = vunpack.c.l.b16 %v1710
        %v1750 = vunpack.c.h.b16 %v1710
        %v1751 = vunpack.c.l.b16 %v1711
        %v1752 = vunpack.c.h.b16 %v1711
        %v1753 = vunpack.c.l.b16 %v1712
        %v1754 = vunpack.c.h.b16 %v1712
        %v1755 = vunpack.c.l.b16 %v1713
        %v1756 = vunpack.c.h.b16 %v1713
        %v1757 = vunpack.c.l.b16 %v1714
        %v1758 = vunpack.c.h.b16 %v1714
        %v1759 = vunpack.c.l.b16 %v1715
        %v1760 = vunpack.c.h.b16 %v1715
        %v1761 = vunpack.c.l.b16 %v1716
        %v1762 = vunpack.c.h.b16 %v1716
        %v1763 = vunpack.c.l.b16 %v1717
        %v1764 = vunpack.c.h.b16 %v1717
        %v1765 = vunpack.c.l.b16 %v1718
        %v1766 = vunpack.c.h.b16 %v1718
        %v1767 = vpack.c.b16 %v1737, %v1735
        %v1768 = vpack.c.b16 %v1738, %v1736
        %v1769 = vpack.c.b16 %v1741, %v1739
        %v1770 = vpack.c.b16 %v1742, %v1740
        %v1771 = vpack.c.b16 %v1745, %v1743
        %v1772 = vpack.c.b16 %v1746, %v1744
        %v1773 = vpack.c.b16 %v1749, %v1747
        %v1774 = vpack.c.b16 %v1750, %v1748
        %v1775 = vpack.c.b16 %v1753, %v1751
        %v1776 = vpack.c.b16 %v1754, %v1752
        %v1777 = vpack.c.b16 %v1757, %v1755
        %v1778 = vpack.c.b16 %v1758, %v1756
        %v1779 = vpack.c.b16 %v1761, %v1759
        %v1780 = vpack.c.b16 %v1762, %v1760
        %v1781 = vpack.c.b16 %v1765, %v1763
        %v1782 = vpack.c.b16 %v1766, %v1764
        %1799 = vmatprep.subr.bf16.mxu0 %v1768
        %1800 = vmatpush1.bf16.msra.mxu0 %v1767
        %1801 = vmatprep.subr.bf16.mxu0 %v1770
        %1802 = vmatpush1.bf16.msra.mxu0 %v1769
        %1803 = vmatprep.subr.bf16.mxu0 %v1772
        %1804 = vmatpush1.bf16.msra.mxu0 %v1771
        %1805 = vmatprep.subr.bf16.mxu0 %v1774
        %1806 = vmatpush1.bf16.msra.mxu0 %v1773
        %1807 = vmatprep.subr.bf16.mxu0 %v1776
        %1808 = vmatpush1.bf16.msra.mxu0 %v1775
        %1809 = vmatprep.subr.bf16.mxu0 %v1778
        %1810 = vmatpush1.bf16.msra.mxu0 %v1777
        %1811 = vmatprep.subr.bf16.mxu0 %v1780
        %1812 = vmatpush1.bf16.msra.mxu0 %v1779
        %1813 = vmatprep.subr.bf16.mxu0 %v1782
        %1814 = vmatpush1.bf16.msra.mxu0 %v1781
        %1815 = vmatprep.subr.bf16.mxu0 0
        %1816 = vmatpush1.bf16.msra.mxu0 0
        %1817 = vmatprep.subr.bf16.mxu0 0
        %1818 = vmatpush1.bf16.msra.mxu0 0
        %1819 = vmatprep.subr.bf16.mxu0 0
        %1820 = vmatpush1.bf16.msra.mxu0 0
        %1821 = vmatprep.subr.bf16.mxu0 0
        %1822 = vmatpush1.bf16.msra.mxu0 0
        %1823 = vmatprep.subr.bf16.mxu0 0
        %1824 = vmatpush1.bf16.msra.mxu0 0
        %1825 = vmatprep.subr.bf16.mxu0 0
        %1826 = vmatpush1.bf16.msra.mxu0 0
        %1827 = vmatprep.subr.bf16.mxu0 0
        %1828 = vmatpush1.bf16.msra.mxu0 0
        %1829 = vmatprep.subr.bf16.mxu0 0
        %1830 = vmatpush1.bf16.msra.mxu0 0
        %1831 = vmatprep.mubr.bf16.mxu0 0
        %1832 = vmatmul.mubr.bf16.gmra.mrb[0].mxu0 %v1702
        %v1833 = vpop.f32.mrb[0].mxu0
        %v1834 = vadd.f32 0.0, %v1833
        %v1835 = vpop.f32.mrb[0].mxu0
        %v1836 = vadd.f32 0.0, %v1835
        %v1837 = vpop.f32.mrb[0].mxu0
        %v1838 = vadd.f32 0.0, %v1837
        %v1839 = vpop.f32.mrb[0].mxu0
        %v1840 = vadd.f32 0.0, %v1839
        %1841 = vdwg.mxu0
        %v1858 = vunpack.c.l.b16 %v1573
        %v1859 = vunpack.c.h.b16 %v1573
        %v1860 = vunpack.c.l.b16 %v1574
        %v1861 = vunpack.c.h.b16 %v1574
        %v1862 = vunpack.c.l.b16 %v1575
        %v1863 = vunpack.c.h.b16 %v1575
        %v1864 = vunpack.c.l.b16 %v1576
        %v1865 = vunpack.c.h.b16 %v1576
        %v1866 = vunpack.c.l.b16 %v1577
        %v1867 = vunpack.c.h.b16 %v1577
        %v1868 = vunpack.c.l.b16 %v1578
        %v1869 = vunpack.c.h.b16 %v1578
        %v1870 = vunpack.c.l.b16 %v1579
        %v1871 = vunpack.c.h.b16 %v1579
        %v1872 = vunpack.c.l.b16 %v1580
        %v1873 = vunpack.c.h.b16 %v1580
        %v1874 = vunpack.c.l.b16 %v1581
        %v1875 = vunpack.c.h.b16 %v1581
        %v1876 = vunpack.c.l.b16 %v1582
        %v1877 = vunpack.c.h.b16 %v1582
        %v1878 = vunpack.c.l.b16 %v1583
        %v1879 = vunpack.c.h.b16 %v1583
        %v1880 = vunpack.c.l.b16 %v1584
        %v1881 = vunpack.c.h.b16 %v1584
        %v1882 = vunpack.c.l.b16 %v1585
        %v1883 = vunpack.c.h.b16 %v1585
        %v1884 = vunpack.c.l.b16 %v1586
        %v1885 = vunpack.c.h.b16 %v1586
        %v1886 = vunpack.c.l.b16 %v1587
        %v1887 = vunpack.c.h.b16 %v1587
        %v1888 = vunpack.c.l.b16 %v1588
        %v1889 = vunpack.c.h.b16 %v1588
        %v1890 = vpack.c.b16 %v1860, %v1858
        %v1891 = vpack.c.b16 %v1861, %v1859
        %v1892 = vpack.c.b16 %v1864, %v1862
        %v1893 = vpack.c.b16 %v1865, %v1863
        %v1894 = vpack.c.b16 %v1868, %v1866
        %v1895 = vpack.c.b16 %v1869, %v1867
        %v1896 = vpack.c.b16 %v1872, %v1870
        %v1897 = vpack.c.b16 %v1873, %v1871
        %v1898 = vpack.c.b16 %v1876, %v1874
        %v1899 = vpack.c.b16 %v1877, %v1875
        %v1900 = vpack.c.b16 %v1880, %v1878
        %v1901 = vpack.c.b16 %v1881, %v1879
        %v1902 = vpack.c.b16 %v1884, %v1882
        %v1903 = vpack.c.b16 %v1885, %v1883
        %v1904 = vpack.c.b16 %v1888, %v1886
        %v1905 = vpack.c.b16 %v1889, %v1887
        %1922 = vmatprep.subr.bf16.mxu0 %v1891
        %1923 = vmatpush1.bf16.msra.mxu0 %v1890
        %1924 = vmatprep.subr.bf16.mxu0 %v1893
        %1925 = vmatpush1.bf16.msra.mxu0 %v1892
        %1926 = vmatprep.subr.bf16.mxu0 %v1895
        %1927 = vmatpush1.bf16.msra.mxu0 %v1894
        %1928 = vmatprep.subr.bf16.mxu0 %v1897
        %1929 = vmatpush1.bf16.msra.mxu0 %v1896
        %1930 = vmatprep.subr.bf16.mxu0 %v1899
        %1931 = vmatpush1.bf16.msra.mxu0 %v1898
        %1932 = vmatprep.subr.bf16.mxu0 %v1901
        %1933 = vmatpush1.bf16.msra.mxu0 %v1900
        %1934 = vmatprep.subr.bf16.mxu0 %v1903
        %1935 = vmatpush1.bf16.msra.mxu0 %v1902
        %1936 = vmatprep.subr.bf16.mxu0 %v1905
        %1937 = vmatpush1.bf16.msra.mxu0 %v1904
        %1938 = vmatprep.subr.bf16.mxu0 0
        %1939 = vmatpush1.bf16.msra.mxu0 0
        %1940 = vmatprep.subr.bf16.mxu0 0
        %1941 = vmatpush1.bf16.msra.mxu0 0
        %1942 = vmatprep.subr.bf16.mxu0 0
        %1943 = vmatpush1.bf16.msra.mxu0 0
        %1944 = vmatprep.subr.bf16.mxu0 0
        %1945 = vmatpush1.bf16.msra.mxu0 0
        %1946 = vmatprep.subr.bf16.mxu0 0
        %1947 = vmatpush1.bf16.msra.mxu0 0
        %1948 = vmatprep.subr.bf16.mxu0 0
        %1949 = vmatpush1.bf16.msra.mxu0 0
        %1950 = vmatprep.subr.bf16.mxu0 0
        %1951 = vmatpush1.bf16.msra.mxu0 0
        %1952 = vmatprep.subr.bf16.mxu0 0
        %1953 = vmatpush1.bf16.msra.mxu0 0
        %1954 = vmatprep.mubr.bf16.mxu0 0
        %1955 = vmatmul.mubr.bf16.gmra.mrb[0].mxu0 %v1572
        %v1956 = vpop.f32.mrb[0].mxu0
        %v1957 = vadd.f32 %v1834, %v1956
        %v1958 = vpop.f32.mrb[0].mxu0
        %v1959 = vadd.f32 %v1836, %v1958
        %v1960 = vpop.f32.mrb[0].mxu0
        %v1961 = vadd.f32 %v1838, %v1960
        %v1962 = vpop.f32.mrb[0].mxu0
        %v1963 = vadd.f32 %v1840, %v1962
        %1964 = vdwg.mxu0
        %s1965 = smul.u32 0, 2
        %s1966 = smul.addr %s1965, 8
        %s1967 = scalar_lea.vmem %s318, %s1966 [#allocation15]
        %v1968 = vld [vmem:[%s1967] sm:$0xff]
        %v1969 = vld [vmem:[%s1967 + $0x8] sm:$0xff]
        %v1970 = vld [vmem:[%s1967 + $0x10] sm:$0xff]
        %v1971 = vld [vmem:[%s1967 + $0x18] sm:$0xff]
        %v1972 = vadd.f32 %v1968, %v1957
        %v1973 = vadd.f32 %v1969, %v1959
        %v1974 = vadd.f32 %v1970, %v1961
        %v1975 = vadd.f32 %v1971, %v1963
        %v1976 = vld [vmem:[%s6] sm:$0x3]
        %v1978 = vlaneseq
        %v1979 = vshrl.u32 %v1978, 7
        %v1980 = vsub.s32 0, %v1979
        %v1981 = vrot.slane %v1976, %v1980
        %v1982 = vlaneseq
        %v1983 = vshrl.u32 %v1982, 7
        %v1984 = vsub.s32 1, %v1983
        %v1985 = vrot.slane %v1976, %v1984
        %v1988 = vadd.f32 %v1972, %v1981
        %v1989 = vadd.f32 %v1973, %v1985
        %v1990 = vadd.f32 %v1974, %v1981
        %v1991 = vadd.f32 %v1975, %v1985
        %1992 = vst [vmem:[%s1967] sm:$0xff] %v1988
        %1993 = vst [vmem:[%s1967 + $0x8] sm:$0xff] %v1989
        %1994 = vst [vmem:[%s1967 + $0x10] sm:$0xff] %v1990
        %1995 = vst [vmem:[%s1967 + $0x18] sm:$0xff] %v1991
        %s1996 = sand.u32 %s169, 1
        %s1997 = scalar_lea.sflag [#allocation9], %s1996
        %s1998 = sand.u32 %s169, 1
        %s1999 = smul.addr %s1998, 32
        %s2000 = scalar_lea.vmem [#allocation15], %s1999
        // Predicated region
        $region61: #{tpu_custom_call.1} parent=43 // pred_check
          %p2001 = pneg %p179
        $region62: #{tpu_custom_call.1} parent=43 // pred_check_branch
          %2003 = sbr.rel (%p2001) target = $region64
        $region63: #{tpu_custom_call.1} parent=43 // pred_region
          %s2005 = ssub.s32 512, 512
          %2006 = vsyncadd %s1997, %s2005
          %s2007 = smul.addr %s30, 4
          %s2008 = smul.addr %s2007, 128
          %s2009 = scalar_lea.hbm %s7, %s2008
          %s2010 = sshll.u32 %s2000, 4
          %s2011 = int_to_ptr.vmem [resolvable:$true] %s2010
          %2016 = dma.vmem_to_hbm [thread:$0]  %s2011, 512, %s2009, %s1997, 256, 256, 16
        $region64: #{tpu_custom_call.1} parent=43 // pred_fallthru
          _
      $region44: #{tpu_custom_call.1} parent=5 // pred_fallthru
        _
      %p2017 = scmp.le.s32.totalorder 2, %s25
      // Predicated region
      $region65: #{tpu_custom_call.1} parent=5 // pred_check
        %p2018 = pneg %p2017
      $region66: #{tpu_custom_call.1} parent=5 // pred_check_branch
        %2020 = sbr.rel (%p2018) target = $region68
      $region67: #{tpu_custom_call.1} parent=5 // pred_region
        %s2021 = ssub.s32 %s25, 2
        // Predicated region
        $region69: #{tpu_custom_call.1} parent=67 // pred_check
          %p2022 = pneg %p185
        $region70: #{tpu_custom_call.1} parent=67 // pred_check_branch
          %2024 = sbr.rel (%p2022) target = $region72
        $region71: #{tpu_custom_call.1} parent=67 // pred_region
          %s2025 = sand.u32 %s170, 1
          %s2026 = scalar_lea.sflag [#allocation9], %s2025
          %s2027 = sand.u32 %s170, 1
          %s2028 = smul.addr %s2027, 32
          %s2029 = scalar_lea.vmem [#allocation15], %s2028
          %2030 = dma.done %s2026, 512
        $region72: #{tpu_custom_call.1} parent=67 // pred_fallthru
          _
      $region68: #{tpu_custom_call.1} parent=5 // pred_fallthru
        _
    $region6: #{tpu_custom_call.1} parent=1 // loop_footer
      %s29 = sadd.s32 1, %s25
    $region7: #{tpu_custom_call.1} parent=1 // loop_footer_branch
      %24 = sbr.rel target = $region3
    $region8: #{tpu_custom_call.1} parent=1 // loop_exit
      _
    %2031 = vsyncpa [#allocation8], 1
    %s2032 = scalar_lea.sflag [#allocation8], 1
    %2033 = vsyncpa %s2032, 1
    %2034 = vsyncpa [#allocation11], 1
    %2035 = vsyncpa [#allocation14], 1
    %2036 = vsyncpa [#allocation9], 1
    %s2037 = scalar_lea.sflag [#allocation9], 1
    %2038 = vsyncpa %s2037, 1

</llo_original>
